<compile_context>
chip_gen: v6e
topology: v6e:2x2x1
jax: 0.10.0
libtpu: 0.0.40
codegen_flags: <defaults>
</compile_context>

<pallas_src>
import functools
import math

import jax
import jax.numpy as jnp
from jax.experimental import pallas as pl
from jax.experimental.pallas import tpu as pltpu

LANE = 128


def _round_up(x, m):
    return ((x + m - 1) // m) * m


# ---------------------------------------------------------------------------
# Pallas kernel: one SAGEConv('gcn') layer, fused aggregate + linear + act
# ---------------------------------------------------------------------------
def _sage_gcn_kernel(a_ref, h_ref, w_ref, b_ref, o_ref, acc_ref, *, apply_relu):
    # a:   (TN, TK) normalized adjacency tile (bf16)
    # h:   (TK, Fp) node-feature tile (bf16)
    # w:   (Fp, Op) fc_neigh weight, VMEM-resident (bf16)
    # b:   (1, Op)  bias (f32), VMEM-resident
    # o:   (TN, Op) output tile
    # acc: (TN, Fp) f32 aggregation accumulator (scratch)
    k = pl.program_id(1)

    @pl.when(k == 0)
    def _init():
        acc_ref[...] = jnp.zeros_like(acc_ref)

    acc_ref[...] += jnp.dot(a_ref[...], h_ref[...],
                            preferred_element_type=jnp.float32)

    @pl.when(k == pl.num_programs(1) - 1)
    def _finalize():
        out = jnp.dot(acc_ref[...].astype(w_ref.dtype), w_ref[...],
                      preferred_element_type=jnp.float32) + b_ref[...]
        if apply_relu:
            out = jnp.maximum(out, 0.0)
        o_ref[...] = out.astype(o_ref.dtype)


def sage_gcn_layer(a_norm, h, w, b, *, apply_relu, out_dtype,
                   tile=256, k_tile=512):
    np_, np2 = a_norm.shape
    assert np_ == np2 and h.shape[0] == np_
    fp = h.shape[1]
    op = w.shape[1]

    tn = min(tile, np_)
    assert np_ % tn == 0
    # K tile over the neighbor/node dimension; collapse to one step for small
    # graphs, otherwise fall back to the row tile (always divides np_).
    tk = np_ if np_ <= k_tile else (k_tile if np_ % k_tile == 0 else tn)
    grid = (np_ // tn, np_ // tk)

    kernel = functools.partial(_sage_gcn_kernel, apply_relu=apply_relu)
    cost = pl.CostEstimate(
        flops=2 * np_ * np_ * fp + 2 * np_ * fp * op,
        transcendentals=0,
        bytes_accessed=(np_ * np_ * 2 + np_ * fp * 2 + fp * op * 2
                        + np_ * op * jnp.dtype(out_dtype).itemsize),
    )
    return pl.pallas_call(
        kernel,
        out_shape=jax.ShapeDtypeStruct((np_, op), out_dtype),
        grid=grid,
        in_specs=[
            pl.BlockSpec((tn, tk), lambda i, k: (i, k)),   # adjacency tile
            pl.BlockSpec((tk, fp), lambda i, k: (k, 0)),   # feature tile
            pl.BlockSpec((fp, op), lambda i, k: (0, 0)),   # weight (resident)
            pl.BlockSpec((1, op), lambda i, k: (0, 0)),    # bias (resident)
        ],
        out_specs=pl.BlockSpec((tn, op), lambda i, k: (i, 0)),
        scratch_shapes=[pltpu.VMEM((tn, fp), jnp.float32)],
        compiler_params=pltpu.CompilerParams(
            dimension_semantics=("parallel", "arbitrary"),
            # Explicit budget (safe on v5e/v6e 128 MiB and v7x 64 MiB); actual
            # usage at these shapes is ~1-2 MiB.
            vmem_limit_bytes=32 * 1024 * 1024,
        ),
        cost_estimate=cost,
    )(a_norm, h, w, b)


# ---------------------------------------------------------------------------
# Parameters (DGL SAGEConv: xavier_uniform fc_neigh weight + nn.Linear bias),
# stored transposed (in, out), zero-padded to 128-lane multiples, bf16 weights.
# ---------------------------------------------------------------------------
def init_params(key, in_feats, n_hidden, n_classes, n_layers):
    # GCN builds: SAGEConv(in,h), (n_layers-1) x SAGEConv(h,h), SAGEConv(h,classes)
    dims = [in_feats] + [n_hidden] * n_layers + [n_classes]
    keys = jax.random.split(key, len(dims) - 1)
    params = []
    for k, fan_in, fan_out in zip(keys, dims[:-1], dims[1:]):
        kw, kb = jax.random.split(k)
        lim_w = math.sqrt(6.0 / (fan_in + fan_out))            # xavier_uniform
        lim_b = 1.0 / math.sqrt(fan_in)                        # nn.Linear bias
        w = jax.random.uniform(kw, (fan_in, fan_out), jnp.float32, -lim_w, lim_w)
        b = jax.random.uniform(kb, (fan_out,), jnp.float32, -lim_b, lim_b)
        fp_in, fp_out = _round_up(fan_in, LANE), _round_up(fan_out, LANE)
        w_p = jnp.zeros((fp_in, fp_out), jnp.float32).at[:fan_in, :fan_out].set(w)
        b_p = jnp.zeros((1, fp_out), jnp.float32).at[0, :fan_out].set(b)
        params.append((w_p.astype(jnp.bfloat16), b_p))
    return params


# ---------------------------------------------------------------------------
# Graph glue: dense row-normalized adjacency (A + I) / (in_deg + 1)
# ---------------------------------------------------------------------------
# TODO(synk): DGL sparse message passing (g.update_all / in_degrees) is replaced
# by a dense normalized adjacency; very large graphs would need a gather kernel.
def build_norm_adj(src, dst, n, n_pad):
    a = jnp.zeros((n, n), jnp.float32).at[dst, src].add(1.0)   # msg src -> dst
    deg = a.sum(axis=1, keepdims=True)                          # in-degree
    a_hat = (a + jnp.eye(n, dtype=jnp.float32)) / (deg + 1.0)
    a_p = jnp.zeros((n_pad, n_pad), jnp.float32).at[:n, :n].set(a_hat)
    return a_p.astype(jnp.bfloat16)


# ---------------------------------------------------------------------------
# Forward pass: GCN.forward(features)
# ---------------------------------------------------------------------------
def gcn_forward(params, a_norm_p, features_p, *, n_real_nodes, n_classes, tile=256):
    h = features_p
    n_convs = len(params)
    for li, (w, b) in enumerate(params):
        # TODO(synk): nn.Dropout between layers is identity in eval mode;
        # training-mode dropout is not implemented.
        last = li == n_convs - 1
        h = sage_gcn_layer(
            a_norm_p, h, w, b,
            apply_relu=not last,                       # activation=relu, None on last
            out_dtype=jnp.float32 if last else jnp.bfloat16,
            tile=tile,
        )
    return h[:n_real_nodes, :n_classes]


def gcn_forward_ref(params, a_norm_p, features_p, *, n_real_nodes, n_classes):
    # Pure-JAX reference mirroring the kernel's dtype flow (bf16 operands,
    # f32 accumulation, bf16 intermediate activations).
    a32 = a_norm_p.astype(jnp.float32)
    h = features_p
    n_convs = len(params)
    for li, (w, b) in enumerate(params):
        last = li == n_convs - 1
        agg = jnp.dot(a32, h.astype(jnp.float32))
        out = jnp.dot(agg.astype(jnp.bfloat16).astype(jnp.float32),
                      w.astype(jnp.float32)) + b
        if not last:
            out = jnp.maximum(out, 0.0)
        h = out.astype(jnp.float32 if last else jnp.bfloat16)
    return h[:n_real_nodes, :n_classes]


# ---------------------------------------------------------------------------
if __name__ == "__main__":
    key = jax.random.PRNGKey(0)
    N, E = 512, 2048
    in_feats, n_hidden, n_classes, n_layers = 64, 32, 8, 2
    tile = 256                                   # row tile; grid rows = 2 steps

    k_feat, k_src, k_dst, k_par = jax.random.split(key, 4)
    features = jax.random.normal(k_feat, (N, in_feats), jnp.float32)
    src = jax.random.randint(k_src, (E,), 0, N, dtype=jnp.int32)
    dst = jax.random.randint(k_dst, (E,), 0, N, dtype=jnp.int32)

    # One-time padding (nodes -> tile multiple, features -> 128 lanes).
    n_pad = _round_up(N, tile)
    f_pad = _round_up(in_feats, LANE)
    a_norm_p = build_norm_adj(src, dst, N, n_pad)
    features_p = (jnp.zeros((n_pad, f_pad), jnp.float32)
                  .at[:N, :in_feats].set(features)).astype(jnp.bfloat16)

    params = init_params(k_par, in_feats, n_hidden, n_classes, n_layers)

    out = gcn_forward(params, a_norm_p, features_p,
                      n_real_nodes=N, n_classes=n_classes, tile=tile)
    out = jax.block_until_ready(out)

    ref = gcn_forward_ref(params, a_norm_p, features_p,
                          n_real_nodes=N, n_classes=n_classes)
    ref = jax.block_until_ready(ref)

    assert out.shape == (N, n_classes)
    assert bool(jnp.all(jnp.isfinite(out)))
    max_err = float(jnp.max(jnp.abs(out - ref)))
    assert max_err < 5e-2, f"mismatch vs reference: {max_err}"
    print("KERNEL_OK")
</pallas_src>

<mosaic_0001>
module attributes {stable_mosaic.version = 11 : i64} {
  func.func @_sage_gcn_kernel(%arg0: i32, %arg1: i32, %arg2: memref<256x512xbf16, #tpu.memory_space<vmem>>, %arg3: memref<512x128xbf16, #tpu.memory_space<vmem>>, %arg4: memref<128x128xbf16, #tpu.memory_space<vmem>>, %arg5: memref<1x128xf32, #tpu.memory_space<vmem>>, %arg6: memref<256x128xbf16, #tpu.memory_space<vmem>>, %arg7: memref<256x128xf32, #tpu.memory_space<vmem>>) attributes {dimension_semantics = [#tpu.dimension_semantics<parallel>, #tpu.dimension_semantics<arbitrary>], iteration_bounds = array<i64: 2, 1>, scalar_prefetch = 0 : i64, scratch_operands = 1 : i64, tpu.core_type = #tpu.core_type<tc>, window_params = [{transform_indices = @transform_0, window_bounds = array<i64: 256, 512>}, {transform_indices = @transform_1, window_bounds = array<i64: 512, 128>}, {pipeline_mode = #tpu.pipeline_mode<synchronous>, transform_indices = @transform_2, window_bounds = array<i64: 128, 128>}, {pipeline_mode = #tpu.pipeline_mode<synchronous>, transform_indices = @transform_3, window_bounds = array<i64: 1, 128>}, {transform_indices = @transform_4, window_bounds = array<i64: 256, 128>}]} {
    %c0_i32 = arith.constant 0 : i32
    %0 = arith.cmpi eq, %arg1, %c0_i32 : i32
    %1 = arith.extui %0 : i1 to i32
    %c0_i32_0 = arith.constant 0 : i32
    %2 = arith.cmpi ne, %1, %c0_i32_0 : i32
    scf.if %2 {
      %cst_10 = arith.constant 0.000000e+00 : f32
      %12 = vector.broadcast %cst_10 : f32 to vector<256x128xf32>
      %c0_11 = arith.constant 0 : index
      %c0_12 = arith.constant 0 : index
      %13 = vector.load %arg7[%c0_11, %c0_12] : memref<256x128xf32, #tpu.memory_space<vmem>>, vector<256x128xf32>
      tpu.vector_store %arg7[%c0_11, %c0_12], %12 {strides = array<i32>} : memref<256x128xf32, #tpu.memory_space<vmem>>, vector<256x128xf32>,
    } else {
    }
    %c0 = arith.constant 0 : index
    %c0_1 = arith.constant 0 : index
    %3 = vector.load %arg7[%c0, %c0_1] : memref<256x128xf32, #tpu.memory_space<vmem>>, vector<256x128xf32>
    %c0_2 = arith.constant 0 : index
    %c0_3 = arith.constant 0 : index
    %4 = vector.load %arg2[%c0_2, %c0_3] : memref<256x512xbf16, #tpu.memory_space<vmem>>, vector<256x512xbf16>
    %c0_4 = arith.constant 0 : index
    %c0_5 = arith.constant 0 : index
    %5 = vector.load %arg3[%c0_4, %c0_5] : memref<512x128xbf16, #tpu.memory_space<vmem>>, vector<512x128xbf16>
    %cst = arith.constant dense<0.000000e+00> : vector<256x128xf32>
    %6 = tpu.matmul %4, %5, %cst {dimension_numbers = #tpu.dot_dimension_numbers<[1], [0], [0], [1], [0, 0, 1, 1], [], []>} : vector<256x512xbf16>, vector<512x128xbf16>, vector<256x128xf32> -> vector<256x128xf32>
    %7 = arith.addf %3, %6 : vector<256x128xf32>
    %c0_6 = arith.constant 0 : index
    %c0_7 = arith.constant 0 : index
    %8 = vector.load %arg7[%c0_6, %c0_7] : memref<256x128xf32, #tpu.memory_space<vmem>>, vector<256x128xf32>
    tpu.vector_store %arg7[%c0_6, %c0_7], %7 {strides = array<i32>} : memref<256x128xf32, #tpu.memory_space<vmem>>, vector<256x128xf32>,
    %c0_i32_8 = arith.constant 0 : i32
    %9 = arith.cmpi eq, %arg1, %c0_i32_8 : i32
    %10 = arith.extui %9 : i1 to i32
    %c0_i32_9 = arith.constant 0 : i32
    %11 = arith.cmpi ne, %10, %c0_i32_9 : i32
    scf.if %11 {
      %c0_10 = arith.constant 0 : index
      %c0_11 = arith.constant 0 : index
      %12 = vector.load %arg7[%c0_10, %c0_11] : memref<256x128xf32, #tpu.memory_space<vmem>>, vector<256x128xf32>
      %13 = arith.truncf %12 : vector<256x128xf32> to vector<256x128xbf16>
      %c0_12 = arith.constant 0 : index
      %c0_13 = arith.constant 0 : index
      %14 = vector.load %arg4[%c0_12, %c0_13] : memref<128x128xbf16, #tpu.memory_space<vmem>>, vector<128x128xbf16>
      %cst_14 = arith.constant dense<0.000000e+00> : vector<256x128xf32>
      %15 = tpu.matmul %13, %14, %cst_14 {dimension_numbers = #tpu.dot_dimension_numbers<[1], [0], [0], [1], [0, 0, 1, 1], [], []>} : vector<256x128xbf16>, vector<128x128xbf16>, vector<256x128xf32> -> vector<256x128xf32>
      %c0_15 = arith.constant 0 : index
      %c0_16 = arith.constant 0 : index
      %16 = vector.load %arg5[%c0_15, %c0_16] : memref<1x128xf32, #tpu.memory_space<vmem>>, vector<1x128xf32>
      %17 = vector.broadcast %16 : vector<1x128xf32> to vector<256x128xf32>
      %18 = arith.addf %15, %17 : vector<256x128xf32>
      %cst_17 = arith.constant 0.000000e+00 : f32
      %19 = vector.broadcast %cst_17 : f32 to vector<256x128xf32>
      %20 = arith.maximumf %18, %19 : vector<256x128xf32>
      %21 = arith.truncf %20 : vector<256x128xf32> to vector<256x128xbf16>
      %c0_18 = arith.constant 0 : index
      %c0_19 = arith.constant 0 : index
      %22 = vector.load %arg6[%c0_18, %c0_19] : memref<256x128xbf16, #tpu.memory_space<vmem>>, vector<256x128xbf16>
      tpu.vector_store %arg6[%c0_18, %c0_19], %21 {strides = array<i32>} : memref<256x128xbf16, #tpu.memory_space<vmem>>, vector<256x128xbf16>,
    } else {
    }
    return
  }
  func.func @transform_0(%arg0: i32, %arg1: i32) -> (i32, i32) {
    %c0_i32 = arith.constant 0 : i32
    return %arg0, %arg1 : i32, i32
  }
  func.func @transform_1(%arg0: i32, %arg1: i32) -> (i32, i32) {
    %c0_i32 = arith.constant 0 : i32
    %c0_i32_0 = arith.constant 0 : i32
    return %arg1, %c0_i32 : i32, i32
  }
  func.func @transform_2(%arg0: i32, %arg1: i32) -> (i32, i32) {
    %c0_i32 = arith.constant 0 : i32
    %c0_i32_0 = arith.constant 0 : i32
    %c0_i32_1 = arith.constant 0 : i32
    return %c0_i32, %c0_i32_0 : i32, i32
  }
  func.func @transform_3(%arg0: i32, %arg1: i32) -> (i32, i32) {
    %c0_i32 = arith.constant 0 : i32
    %c0_i32_0 = arith.constant 0 : i32
    %c0_i32_1 = arith.constant 0 : i32
    return %c0_i32, %c0_i32_0 : i32, i32
  }
  func.func @transform_4(%arg0: i32, %arg1: i32) -> (i32, i32) {
    %c0_i32 = arith.constant 0 : i32
    %c0_i32_0 = arith.constant 0 : i32
    return %arg0, %c0_i32 : i32, i32
  }
}

</mosaic_0001>

<llo_original>
// kernel: tpu_custom_call.1
$region0: #{tpu_custom_call.1}
  #allocation0 [shape = 'u32[]', space=smem, size = 0x4, offset = 0x4, fixed_abs, tag = 'smem constant byte address 0x4 - core index']
  #allocation1 [shape = 'u32[144,128]{1,0:T(1,128)}', space=vmem, size = 0x12000, scoped, tag = 'internal scratch']
  #allocation2 [shape = 'f32[256,128]{1,0:T(8,128)}', space=vmem, size = 0x20000, scoped, tag = 'scratch operand']
  %s0 = inlined_call_operand.hbm [shape: bf16[512,512], index: 0, kind: input, shape index: {}]
  %s1 = inlined_call_operand.hbm [shape: bf16[512,128], index: 1, kind: input, shape index: {}]
  %s2 = inlined_call_operand.hbm [shape: bf16[128,128], index: 2, kind: input, shape index: {}]
  %s3 = inlined_call_operand.vmem [shape: f32[1,128], index: 3, kind: input, shape index: {}]
  %s4 = inlined_call_operand.hbm [shape: bf16[512,128], index: 4, kind: output, shape index: {}]
  %s5 = sld [smem:[#allocation0]]
  $region69: #{tpu_custom_call.1} parent=0
    _
  %s7 = ssub.s32 1, %s5
  %s8 = scalar_select 0, %s7, %s5
  $region1: #{tpu_custom_call.1} parent=0
    #allocation3 [shape = 'u8[524288]{0}', space=vmem, size = 0x80000, scoped, tag = 'input window, operand 0']
    #allocation4 [shape = 's32[2]{0}', space=sflag, size = 0x8, scoped, tag = 'scoped memory for tpu_custom_call.1']
    #allocation5 [shape = 's32[2]{0}', space=sflag, size = 0x8, scoped, tag = 'scoped memory for tpu_custom_call.1']
    #allocation6 [shape = 'u8[131072]{0}', space=vmem, size = 0x20000, scoped, tag = 'input window, operand 1, single buffered']
    #allocation7 [shape = 's32[1]{0}', space=sflag, size = 0x4, scoped, tag = 'scoped memory for tpu_custom_call.1']
    #allocation8 [shape = 'u8[32768]{0}', space=vmem, size = 0x8000, scoped, tag = 'input window, operand 2, single buffered']
    #allocation9 [shape = 'u8[131072]{0}', space=vmem, size = 0x20000, scoped, tag = 'output window, operand 0']
    %9 = vsyncpa [#allocation4], 0
    %s10 = scalar_lea.sflag [#allocation4], 1
    %11 = vsyncpa %s10, 0
    %12 = vsyncpa [#allocation7], 0
    %13 = vsyncpa [#allocation5], 0
    %s14 = scalar_lea.sflag [#allocation5], 1
    %15 = vsyncpa %s14, 0
    loop: start=0, step=1, limit=4
    $region2: #{tpu_custom_call.1} parent=1 // loop_pre_header
      _
    $region3: #{tpu_custom_call.1} parent=1 // loop_header
      %s17 = sphi 0, %s21
      %p18 = scmp.ge.s32.totalorder %s17, 4
      %s24 = sphi 0, %s36
      %s25 = sphi 0, %s32
      %s26 = sphi 0, %s24
      %s27 = sphi 0, %s25
      %s28 = sphi 0, %s26
      %s29 = sphi 0, %s27
      %s41 = sphi 0, %s43
      %s44 = sphi 0, %s41
      %s45 = sphi 0, %s44
      %s61 = sphi 0, %s45
      %s67 = sphi 0, %s69
      %s70 = sphi 0, %s67
      %s71 = sphi 0, %s70
      %s87 = sphi 0, %s71
      %s91 = sphi 0, %s91
      %s93 = sphi 0, %s91
      %s94 = sphi 0, %s93
      %s108 = sphi 0, %s94
      %s112 = sphi 0, %s112
      %s114 = sphi 0, %s112
      %s115 = sphi 0, %s114
      %s129 = sphi 0, %s115
      %s135 = sphi 0, %s137
      %s138 = sphi 0, %s135
      %s139 = sphi 0, %s138
      %s155 = sphi 0, %s139
    $region4: #{tpu_custom_call.1} parent=1 // loop_header_branch
      %20 = sbr.rel (%p18) target = $region8
    $region5: #{tpu_custom_call.1} parent=1 // loop_body
      %s22 = ssub.s32 %s17, 1
      %s23 = ssub.s32 %s17, 2
      %s30 = sadd.s32 1, %s25
      %p31 = scmp.ge.s32.totalorder %s30, 1
      %s32 = scalar_select %p31, 0, %s30
      %s33 = sadd.s32 1, %s24
      %s34 = scalar_select %p31, %s33, %s24
      %p35 = scmp.ge.s32.totalorder %s34, 2
      %s36 = scalar_select %p35, 0, %s34
      %s37 = ssub.s32 %s24, %s36
      %s38 = ssub.s32 %s25, %s32
      %s39 = sor.u32 %s37, %s38
      %p40 = scmp.eq.s32.totalorder %s39, 0
      %s42 = sadd.s32 %s41, 1
      %s43 = scalar_select %p40, %s41, %s42
      %p46 = pneg %p40
      %p47 = scmp.eq.s32.totalorder %s17, 1
      %p48 = por %p46, %p47
      %p49 = scmp.ne.s32.totalorder %s41, %s44
      %p50 = scmp.eq.s32.totalorder %s17, 0
      %p51 = por %p49, %p50
      %p52 = scmp.ne.s32.totalorder %s41, %s44
      %p53 = scmp.eq.s32.totalorder %s22, 1
      %p54 = por %p52, %p53
      %p55 = scmp.ne.s32.totalorder %s44, %s45
      %p56 = scmp.eq.s32.totalorder %s22, 0
      %p57 = por %p55, %p56
      %p58 = scmp.ne.s32.totalorder %s44, %s45
      %p59 = scmp.eq.s32.totalorder %s23, 1
      %p60 = por %p58, %p59
      %p62 = scmp.ne.s32.totalorder %s45, %s61
      %p63 = scmp.eq.s32.totalorder %s23, 0
      %p64 = por %p62, %p63
      %s65 = ssub.s32 %s25, %s32
      %p66 = scmp.eq.s32.totalorder %s65, 0
      %s68 = sadd.s32 %s67, 1
      %s69 = scalar_select %p66, %s67, %s68
      %p72 = pneg %p66
      %p73 = scmp.eq.s32.totalorder %s17, 1
      %p74 = por %p72, %p73
      %p75 = scmp.ne.s32.totalorder %s67, %s70
      %p76 = scmp.eq.s32.totalorder %s17, 0
      %p77 = por %p75, %p76
      %p78 = scmp.ne.s32.totalorder %s67, %s70
      %p79 = scmp.eq.s32.totalorder %s22, 1
      %p80 = por %p78, %p79
      %p81 = scmp.ne.s32.totalorder %s70, %s71
      %p82 = scmp.eq.s32.totalorder %s22, 0
      %p83 = por %p81, %p82
      %p84 = scmp.ne.s32.totalorder %s70, %s71
      %p85 = scmp.eq.s32.totalorder %s23, 1
      %p86 = por %p84, %p85
      %p88 = scmp.ne.s32.totalorder %s71, %s87
      %p89 = scmp.eq.s32.totalorder %s23, 0
      %p90 = por %p88, %p89
      %s92 = sadd.s32 %s91, 1
      %p95 = scmp.eq.s32.totalorder %s17, 1
      %p96 = scmp.ne.s32.totalorder %s91, %s93
      %p97 = scmp.eq.s32.totalorder %s17, 0
      %p98 = por %p96, %p97
      %p99 = scmp.ne.s32.totalorder %s91, %s93
      %p100 = scmp.eq.s32.totalorder %s22, 1
      %p101 = por %p99, %p100
      %p102 = scmp.ne.s32.totalorder %s93, %s94
      %p103 = scmp.eq.s32.totalorder %s22, 0
      %p104 = por %p102, %p103
      %p105 = scmp.ne.s32.totalorder %s93, %s94
      %p106 = scmp.eq.s32.totalorder %s23, 1
      %p107 = por %p105, %p106
      %p109 = scmp.ne.s32.totalorder %s94, %s108
      %p110 = scmp.eq.s32.totalorder %s23, 0
      %p111 = por %p109, %p110
      %s113 = sadd.s32 %s112, 1
      %p116 = scmp.eq.s32.totalorder %s17, 1
      %p117 = scmp.ne.s32.totalorder %s112, %s114
      %p118 = scmp.eq.s32.totalorder %s17, 0
      %p119 = por %p117, %p118
      %p120 = scmp.ne.s32.totalorder %s112, %s114
      %p121 = scmp.eq.s32.totalorder %s22, 1
      %p122 = por %p120, %p121
      %p123 = scmp.ne.s32.totalorder %s114, %s115
      %p124 = scmp.eq.s32.totalorder %s22, 0
      %p125 = por %p123, %p124
      %p126 = scmp.ne.s32.totalorder %s114, %s115
      %p127 = scmp.eq.s32.totalorder %s23, 1
      %p128 = por %p126, %p127
      %p130 = scmp.ne.s32.totalorder %s115, %s129
      %p131 = scmp.eq.s32.totalorder %s23, 0
      %p132 = por %p130, %p131
      %s133 = ssub.s32 %s24, %s36
      %p134 = scmp.eq.s32.totalorder %s133, 0
      %s136 = sadd.s32 %s135, 1
      %s137 = scalar_select %p134, %s135, %s136
      %p140 = pneg %p134
      %p141 = scmp.eq.s32.totalorder %s17, 1
      %p142 = por %p140, %p141
      %p143 = scmp.ne.s32.totalorder %s135, %s138
      %p144 = scmp.eq.s32.totalorder %s17, 0
      %p145 = por %p143, %p144
      %p146 = scmp.ne.s32.totalorder %s135, %s138
      %p147 = scmp.eq.s32.totalorder %s22, 1
      %p148 = por %p146, %p147
      %p149 = scmp.ne.s32.totalorder %s138, %s139
      %p150 = scmp.eq.s32.totalorder %s22, 0
      %p151 = por %p149, %p150
      %p152 = scmp.ne.s32.totalorder %s138, %s139
      %p153 = scmp.eq.s32.totalorder %s23, 1
      %p154 = por %p152, %p153
      %p156 = scmp.ne.s32.totalorder %s139, %s155
      %p157 = scmp.eq.s32.totalorder %s23, 0
      %p158 = por %p156, %p157
      %p159 = scmp.le.s32.totalorder 1, %s17
      %p160 = scmp.lt.s32.totalorder %s17, 3
      %p161 = pnand %p159, %p160
      %p162 = pneg %p161
      // Predicated region
      $region9: #{tpu_custom_call.1} parent=5 // pred_check
        _
      $region10: #{tpu_custom_call.1} parent=5 // pred_check_branch
        %164 = sbr.rel (%p161) target = $region12
      $region11: #{tpu_custom_call.1} parent=5 // pred_region
        %s165 = ssub.s32 %s17, 1
        // Predicated region
        $region13: #{tpu_custom_call.1} parent=11 // pred_check
          %p166 = pneg %p83
        $region14: #{tpu_custom_call.1} parent=11 // pred_check_branch
          %168 = sbr.rel (%p166) target = $region16
        $region15: #{tpu_custom_call.1} parent=11 // pred_region
          %s169 = smul.u32 64, %s27
          %s171 = ssub.s32 4096, 4096
          %172 = vsyncadd [#allocation7], %s171
          %s173 = smul.addr %s169, 64
          %s174 = scalar_lea.hbm %s1, %s173
          %s175 = sshll.u32 [#allocation6], 4
          %s176 = int_to_ptr.vmem [resolvable:$true] %s175
          %181 = dma.hbm_to_vmem [thread:$0]  %s174, 4096, %s176, [#allocation7], 64, 64, 4
        $region16: #{tpu_custom_call.1} parent=11 // pred_fallthru
          _
        // Predicated region
        $region17: #{tpu_custom_call.1} parent=11 // pred_check
          %p182 = pneg %p104
        $region18: #{tpu_custom_call.1} parent=11 // pred_check_branch
          %184 = sbr.rel (%p182) target = $region20
        $region19: #{tpu_custom_call.1} parent=11 // pred_region
          %s186 = ssub.s32 1024, 1024
          %187 = vsyncadd [#allocation7], %s186
          %s188 = sshll.u32 [#allocation8], 4
          %s189 = int_to_ptr.vmem [resolvable:$true] %s188
          %194 = dma.hbm_to_vmem [thread:$0]  %s2, 1024, %s189, [#allocation7], 64, 64, 4
        $region20: #{tpu_custom_call.1} parent=11 // pred_fallthru
          _
        // Predicated region
        $region21: #{tpu_custom_call.1} parent=11 // pred_check
          %p195 = pneg %p125
        $region22: #{tpu_custom_call.1} parent=11 // pred_check_branch
          %197 = sbr.rel (%p195) target = $region24
        $region23: #{tpu_custom_call.1} parent=11 // pred_region
          _
        $region24: #{tpu_custom_call.1} parent=11 // pred_fallthru
          _
      $region12: #{tpu_custom_call.1} parent=5 // pred_fallthru
        _
      %p198 = scmp.lt.s32.totalorder %s17, 2
      // Predicated region
      $region25: #{tpu_custom_call.1} parent=5 // pred_check
        %p199 = pneg %p198
      $region26: #{tpu_custom_call.1} parent=5 // pred_check_branch
        %201 = sbr.rel (%p199) target = $region28
      $region27: #{tpu_custom_call.1} parent=5 // pred_region
        // Predicated region
        $region29: #{tpu_custom_call.1} parent=27 // pred_check
          %p202 = pneg %p51
        $region30: #{tpu_custom_call.1} parent=27 // pred_check_branch
          %204 = sbr.rel (%p202) target = $region32
        $region31: #{tpu_custom_call.1} parent=27 // pred_region
          %s205 = sand.u32 %s41, 1
          %s206 = scalar_lea.sflag [#allocation4], %s205
          %s207 = sand.u32 %s41, 1
          %s208 = smul.addr %s207, 512
          %s209 = scalar_lea.vmem [#allocation3], %s208
          %s210 = smul.u32 32, %s24
          %s211 = smul.u32 4, %s25
          %s213 = ssub.s32 8192, 8192
          %214 = vsyncadd %s206, %s213
          %s215 = smul.addr %s210, 4
          %s216 = sadd.s32 %s211, %s215
          %s217 = smul.addr %s216, 64
          %s218 = scalar_lea.hbm %s0, %s217
          %s219 = sshll.u32 %s209, 4
          %s220 = int_to_ptr.vmem [resolvable:$true] %s219
          %225 = dma.hbm_to_vmem [thread:$0]  %s218, 8192, %s220, %s206, 256, 256, 16
        $region32: #{tpu_custom_call.1} parent=27 // pred_fallthru
          _
      $region28: #{tpu_custom_call.1} parent=5 // pred_fallthru
        _
      %p226 = scmp.le.s32.totalorder 1, %s17
      %p227 = scmp.lt.s32.totalorder %s17, 3
      %p228 = pnand %p226, %p227
      %p229 = pneg %p228
      // Predicated region
      $region33: #{tpu_custom_call.1} parent=5 // pred_check
        _
      $region34: #{tpu_custom_call.1} parent=5 // pred_check_branch
        %231 = sbr.rel (%p228) target = $region36
      $region35: #{tpu_custom_call.1} parent=5 // pred_region
        %s232 = ssub.s32 %s17, 1
        %s233 = sand.u32 %s44, 1
        %s234 = scalar_lea.sflag [#allocation4], %s233
        %s235 = sand.u32 %s44, 1
        %s236 = smul.addr %s235, 512
        %s237 = scalar_lea.vmem [#allocation3], %s236
        // Predicated region
        $region37: #{tpu_custom_call.1} parent=35 // pred_check
          %p238 = pneg %p57
        $region38: #{tpu_custom_call.1} parent=35 // pred_check_branch
          %240 = sbr.rel (%p238) target = $region40
        $region39: #{tpu_custom_call.1} parent=35 // pred_region
          %241 = dma.done %s234, 8192
        $region40: #{tpu_custom_call.1} parent=35 // pred_fallthru
          _
        // Predicated region
        $region41: #{tpu_custom_call.1} parent=35 // pred_check
          %p242 = pneg %p83
        $region42: #{tpu_custom_call.1} parent=35 // pred_check_branch
          %244 = sbr.rel (%p242) target = $region44
        $region43: #{tpu_custom_call.1} parent=35 // pred_region
          %245 = dma.done [#allocation7], 4096
        $region44: #{tpu_custom_call.1} parent=35 // pred_fallthru
          _
        // Predicated region
        $region45: #{tpu_custom_call.1} parent=35 // pred_check
          %p246 = pneg %p104
        $region46: #{tpu_custom_call.1} parent=35 // pred_check_branch
          %248 = sbr.rel (%p246) target = $region48
        $region47: #{tpu_custom_call.1} parent=35 // pred_region
          %249 = dma.done [#allocation7], 1024
        $region48: #{tpu_custom_call.1} parent=35 // pred_fallthru
          _
        %s250 = sand.u32 %s44, 1
        %s251 = scalar_lea.sflag [#allocation4], %s250
        %s252 = sand.u32 %s44, 1
        %s253 = smul.addr %s252, 512
        %s254 = scalar_lea.vmem [#allocation3], %s253
        %p255 = pneg %p57
        %p256 = pneg %p54
        %p257 = pneg %p83
        %p258 = pneg %p80
        %p259 = pneg %p104
        %p260 = pneg %p101
        %p261 = pneg %p125
        %p262 = pneg %p122
        %p263 = pneg %p151
        %p264 = pneg %p148
        %s265 = sand.u32 %s138, 1
        %s266 = scalar_lea.sflag [#allocation5], %s265
        %s267 = sand.u32 %s138, 1
        %s268 = smul.addr %s267, 128
        %s269 = scalar_lea.vmem [#allocation9], %s268
        %s270 = smul.u32 32, %s26
        %s271 = smul.u32 4, %s27
        %s272 = smul.u32 64, %s27
        %s273 = smul.u32 32, %s26
        %p275 = scmp.eq.s32.totalorder %s27, 0
        // Predicated region
        $region49: #{tpu_custom_call.1} parent=35 // pred_check
          %p276 = pneg %p275
        $region50: #{tpu_custom_call.1} parent=35 // pred_check_branch
          %278 = sbr.rel (%p276) target = $region52
        $region51: #{tpu_custom_call.1} parent=35 // pred_region
          %279 = vst [vmem:[#allocation2] sm:$0xff] 0.0
          %280 = vst [vmem:[#allocation2 + $0x8] sm:$0xff] 0.0
          %281 = vst [vmem:[#allocation2 + $0x10] sm:$0xff] 0.0
          %282 = vst [vmem:[#allocation2 + $0x18] sm:$0xff] 0.0
          %283 = vst [vmem:[#allocation2 + $0x20] sm:$0xff] 0.0
          %284 = vst [vmem:[#allocation2 + $0x28] sm:$0xff] 0.0
          %285 = vst [vmem:[#allocation2 + $0x30] sm:$0xff] 0.0
          %286 = vst [vmem:[#allocation2 + $0x38] sm:$0xff] 0.0
          %287 = vst [vmem:[#allocation2 + $0x40] sm:$0xff] 0.0
          %288 = vst [vmem:[#allocation2 + $0x48] sm:$0xff] 0.0
          %289 = vst [vmem:[#allocation2 + $0x50] sm:$0xff] 0.0
          %290 = vst [vmem:[#allocation2 + $0x58] sm:$0xff] 0.0
          %291 = vst [vmem:[#allocation2 + $0x60] sm:$0xff] 0.0
          %292 = vst [vmem:[#allocation2 + $0x68] sm:$0xff] 0.0
          %293 = vst [vmem:[#allocation2 + $0x70] sm:$0xff] 0.0
          %294 = vst [vmem:[#allocation2 + $0x78] sm:$0xff] 0.0
          %295 = vst [vmem:[#allocation2 + $0x80] sm:$0xff] 0.0
          %296 = vst [vmem:[#allocation2 + $0x88] sm:$0xff] 0.0
          %297 = vst [vmem:[#allocation2 + $0x90] sm:$0xff] 0.0
          %298 = vst [vmem:[#allocation2 + $0x98] sm:$0xff] 0.0
          %299 = vst [vmem:[#allocation2 + $0xa0] sm:$0xff] 0.0
          %300 = vst [vmem:[#allocation2 + $0xa8] sm:$0xff] 0.0
          %301 = vst [vmem:[#allocation2 + $0xb0] sm:$0xff] 0.0
          %302 = vst [vmem:[#allocation2 + $0xb8] sm:$0xff] 0.0
          %303 = vst [vmem:[#allocation2 + $0xc0] sm:$0xff] 0.0
          %304 = vst [vmem:[#allocation2 + $0xc8] sm:$0xff] 0.0
          %305 = vst [vmem:[#allocation2 + $0xd0] sm:$0xff] 0.0
          %306 = vst [vmem:[#allocation2 + $0xd8] sm:$0xff] 0.0
          %307 = vst [vmem:[#allocation2 + $0xe0] sm:$0xff] 0.0
          %308 = vst [vmem:[#allocation2 + $0xe8] sm:$0xff] 0.0
          %309 = vst [vmem:[#allocation2 + $0xf0] sm:$0xff] 0.0
          %310 = vst [vmem:[#allocation2 + $0xf8] sm:$0xff] 0.0
        $region52: #{tpu_custom_call.1} parent=35 // pred_fallthru
          _
        %v311 = vld [vmem:[#allocation2] sm:$0xff]
        %v312 = vld [vmem:[#allocation2 + $0x8] sm:$0xff]
        %v313 = vld [vmem:[#allocation2 + $0x10] sm:$0xff]
        %v314 = vld [vmem:[#allocation2 + $0x18] sm:$0xff]
        %v315 = vld [vmem:[#allocation2 + $0x20] sm:$0xff]
        %v316 = vld [vmem:[#allocation2 + $0x28] sm:$0xff]
        %v317 = vld [vmem:[#allocation2 + $0x30] sm:$0xff]
        %v318 = vld [vmem:[#allocation2 + $0x38] sm:$0xff]
        %v319 = vld [vmem:[#allocation2 + $0x40] sm:$0xff]
        %v320 = vld [vmem:[#allocation2 + $0x48] sm:$0xff]
        %v321 = vld [vmem:[#allocation2 + $0x50] sm:$0xff]
        %v322 = vld [vmem:[#allocation2 + $0x58] sm:$0xff]
        %v323 = vld [vmem:[#allocation2 + $0x60] sm:$0xff]
        %v324 = vld [vmem:[#allocation2 + $0x68] sm:$0xff]
        %v325 = vld [vmem:[#allocation2 + $0x70] sm:$0xff]
        %v326 = vld [vmem:[#allocation2 + $0x78] sm:$0xff]
        %v327 = vld [vmem:[#allocation2 + $0x80] sm:$0xff]
        %v328 = vld [vmem:[#allocation2 + $0x88] sm:$0xff]
        %v329 = vld [vmem:[#allocation2 + $0x90] sm:$0xff]
        %v330 = vld [vmem:[#allocation2 + $0x98] sm:$0xff]
        %v331 = vld [vmem:[#allocation2 + $0xa0] sm:$0xff]
        %v332 = vld [vmem:[#allocation2 + $0xa8] sm:$0xff]
        %v333 = vld [vmem:[#allocation2 + $0xb0] sm:$0xff]
        %v334 = vld [vmem:[#allocation2 + $0xb8] sm:$0xff]
        %v335 = vld [vmem:[#allocation2 + $0xc0] sm:$0xff]
        %v336 = vld [vmem:[#allocation2 + $0xc8] sm:$0xff]
        %v337 = vld [vmem:[#allocation2 + $0xd0] sm:$0xff]
        %v338 = vld [vmem:[#allocation2 + $0xd8] sm:$0xff]
        %v339 = vld [vmem:[#allocation2 + $0xe0] sm:$0xff]
        %v340 = vld [vmem:[#allocation2 + $0xe8] sm:$0xff]
        %v341 = vld [vmem:[#allocation2 + $0xf0] sm:$0xff]
        %v342 = vld [vmem:[#allocation2 + $0xf8] sm:$0xff]
        %v343 = vld [vmem:[%s237] sm:$0xff]
        %v344 = vld [vmem:[%s237 + $0x8] sm:$0xff]
        %v345 = vld [vmem:[%s237 + $0x10] sm:$0xff]
        %v346 = vld [vmem:[%s237 + $0x18] sm:$0xff]
        %v347 = vld [vmem:[%s237 + $0x20] sm:$0xff]
        %v348 = vld [vmem:[%s237 + $0x28] sm:$0xff]
        %v349 = vld [vmem:[%s237 + $0x30] sm:$0xff]
        %v350 = vld [vmem:[%s237 + $0x38] sm:$0xff]
        %v351 = vld [vmem:[%s237 + $0x40] sm:$0xff]
        %v352 = vld [vmem:[%s237 + $0x48] sm:$0xff]
        %v353 = vld [vmem:[%s237 + $0x50] sm:$0xff]
        %v354 = vld [vmem:[%s237 + $0x58] sm:$0xff]
        %v355 = vld [vmem:[%s237 + $0x60] sm:$0xff]
        %v356 = vld [vmem:[%s237 + $0x68] sm:$0xff]
        %v357 = vld [vmem:[%s237 + $0x70] sm:$0xff]
        %v358 = vld [vmem:[%s237 + $0x78] sm:$0xff]
        %v359 = vld [vmem:[%s237 + $0x80] sm:$0xff]
        %v360 = vld [vmem:[%s237 + $0x88] sm:$0xff]
        %v361 = vld [vmem:[%s237 + $0x90] sm:$0xff]
        %v362 = vld [vmem:[%s237 + $0x98] sm:$0xff]
        %v363 = vld [vmem:[%s237 + $0xa0] sm:$0xff]
        %v364 = vld [vmem:[%s237 + $0xa8] sm:$0xff]
        %v365 = vld [vmem:[%s237 + $0xb0] sm:$0xff]
        %v366 = vld [vmem:[%s237 + $0xb8] sm:$0xff]
        %v367 = vld [vmem:[%s237 + $0xc0] sm:$0xff]
        %v368 = vld [vmem:[%s237 + $0xc8] sm:$0xff]
        %v369 = vld [vmem:[%s237 + $0xd0] sm:$0xff]
        %v370 = vld [vmem:[%s237 + $0xd8] sm:$0xff]
        %v371 = vld [vmem:[%s237 + $0xe0] sm:$0xff]
        %v372 = vld [vmem:[%s237 + $0xe8] sm:$0xff]
        %v373 = vld [vmem:[%s237 + $0xf0] sm:$0xff]
        %v374 = vld [vmem:[%s237 + $0xf8] sm:$0xff]
        %v375 = vld [vmem:[%s237 + $0x100] sm:$0xff]
        %v376 = vld [vmem:[%s237 + $0x108] sm:$0xff]
        %v377 = vld [vmem:[%s237 + $0x110] sm:$0xff]
        %v378 = vld [vmem:[%s237 + $0x118] sm:$0xff]
        %v379 = vld [vmem:[%s237 + $0x120] sm:$0xff]
        %v380 = vld [vmem:[%s237 + $0x128] sm:$0xff]
        %v381 = vld [vmem:[%s237 + $0x130] sm:$0xff]
        %v382 = vld [vmem:[%s237 + $0x138] sm:$0xff]
        %v383 = vld [vmem:[%s237 + $0x140] sm:$0xff]
        %v384 = vld [vmem:[%s237 + $0x148] sm:$0xff]
        %v385 = vld [vmem:[%s237 + $0x150] sm:$0xff]
        %v386 = vld [vmem:[%s237 + $0x158] sm:$0xff]
        %v387 = vld [vmem:[%s237 + $0x160] sm:$0xff]
        %v388 = vld [vmem:[%s237 + $0x168] sm:$0xff]
        %v389 = vld [vmem:[%s237 + $0x170] sm:$0xff]
        %v390 = vld [vmem:[%s237 + $0x178] sm:$0xff]
        %v391 = vld [vmem:[%s237 + $0x180] sm:$0xff]
        %v392 = vld [vmem:[%s237 + $0x188] sm:$0xff]
        %v393 = vld [vmem:[%s237 + $0x190] sm:$0xff]
        %v394 = vld [vmem:[%s237 + $0x198] sm:$0xff]
        %v395 = vld [vmem:[%s237 + $0x1a0] sm:$0xff]
        %v396 = vld [vmem:[%s237 + $0x1a8] sm:$0xff]
        %v397 = vld [vmem:[%s237 + $0x1b0] sm:$0xff]
        %v398 = vld [vmem:[%s237 + $0x1b8] sm:$0xff]
        %v399 = vld [vmem:[%s237 + $0x1c0] sm:$0xff]
        %v400 = vld [vmem:[%s237 + $0x1c8] sm:$0xff]
        %v401 = vld [vmem:[%s237 + $0x1d0] sm:$0xff]
        %v402 = vld [vmem:[%s237 + $0x1d8] sm:$0xff]
        %v403 = vld [vmem:[%s237 + $0x1e0] sm:$0xff]
        %v404 = vld [vmem:[%s237 + $0x1e8] sm:$0xff]
        %v405 = vld [vmem:[%s237 + $0x1f0] sm:$0xff]
        %v406 = vld [vmem:[%s237 + $0x1f8] sm:$0xff]
        %v407 = vld [vmem:[#allocation6] sm:$0xf]
        %v408 = vld [vmem:[#allocation6 + $0x4] sm:$0xf]
        %v409 = vld [vmem:[#allocation6 + $0x8] sm:$0xf]
        %v410 = vld [vmem:[#allocation6 + $0xc] sm:$0xf]
        %v411 = vld [vmem:[#allocation6 + $0x10] sm:$0xf]
        %v412 = vld [vmem:[#allocation6 + $0x14] sm:$0xf]
        %v413 = vld [vmem:[#allocation6 + $0x18] sm:$0xf]
        %v414 = vld [vmem:[#allocation6 + $0x1c] sm:$0xf]
        %v415 = vld [vmem:[#allocation6 + $0x20] sm:$0xf]
        %v416 = vld [vmem:[#allocation6 + $0x24] sm:$0xf]
        %v417 = vld [vmem:[#allocation6 + $0x28] sm:$0xf]
        %v418 = vld [vmem:[#allocation6 + $0x2c] sm:$0xf]
        %v419 = vld [vmem:[#allocation6 + $0x30] sm:$0xf]
        %v420 = vld [vmem:[#allocation6 + $0x34] sm:$0xf]
        %v421 = vld [vmem:[#allocation6 + $0x38] sm:$0xf]
        %v422 = vld [vmem:[#allocation6 + $0x3c] sm:$0xf]
        %v423 = vld [vmem:[#allocation6 + $0x40] sm:$0xf]
        %v424 = vld [vmem:[#allocation6 + $0x44] sm:$0xf]
        %v425 = vld [vmem:[#allocation6 + $0x48] sm:$0xf]
        %v426 = vld [vmem:[#allocation6 + $0x4c] sm:$0xf]
        %v427 = vld [vmem:[#allocation6 + $0x50] sm:$0xf]
        %v428 = vld [vmem:[#allocation6 + $0x54] sm:$0xf]
        %v429 = vld [vmem:[#allocation6 + $0x58] sm:$0xf]
        %v430 = vld [vmem:[#allocation6 + $0x5c] sm:$0xf]
        %v431 = vld [vmem:[#allocation6 + $0x60] sm:$0xf]
        %v432 = vld [vmem:[#allocation6 + $0x64] sm:$0xf]
        %v433 = vld [vmem:[#allocation6 + $0x68] sm:$0xf]
        %v434 = vld [vmem:[#allocation6 + $0x6c] sm:$0xf]
        %v435 = vld [vmem:[#allocation6 + $0x70] sm:$0xf]
        %v436 = vld [vmem:[#allocation6 + $0x74] sm:$0xf]
        %v437 = vld [vmem:[#allocation6 + $0x78] sm:$0xf]
        %v438 = vld [vmem:[#allocation6 + $0x7c] sm:$0xf]
        %v439 = vld [vmem:[#allocation6 + $0x80] sm:$0xf]
        %v440 = vld [vmem:[#allocation6 + $0x84] sm:$0xf]
        %v441 = vld [vmem:[#allocation6 + $0x88] sm:$0xf]
        %v442 = vld [vmem:[#allocation6 + $0x8c] sm:$0xf]
        %v443 = vld [vmem:[#allocation6 + $0x90] sm:$0xf]
        %v444 = vld [vmem:[#allocation6 + $0x94] sm:$0xf]
        %v445 = vld [vmem:[#allocation6 + $0x98] sm:$0xf]
        %v446 = vld [vmem:[#allocation6 + $0x9c] sm:$0xf]
        %v447 = vld [vmem:[#allocation6 + $0xa0] sm:$0xf]
        %v448 = vld [vmem:[#allocation6 + $0xa4] sm:$0xf]
        %v449 = vld [vmem:[#allocation6 + $0xa8] sm:$0xf]
        %v450 = vld [vmem:[#allocation6 + $0xac] sm:$0xf]
        %v451 = vld [vmem:[#allocation6 + $0xb0] sm:$0xf]
        %v452 = vld [vmem:[#allocation6 + $0xb4] sm:$0xf]
        %v453 = vld [vmem:[#allocation6 + $0xb8] sm:$0xf]
        %v454 = vld [vmem:[#allocation6 + $0xbc] sm:$0xf]
        %v455 = vld [vmem:[#allocation6 + $0xc0] sm:$0xf]
        %v456 = vld [vmem:[#allocation6 + $0xc4] sm:$0xf]
        %v457 = vld [vmem:[#allocation6 + $0xc8] sm:$0xf]
        %v458 = vld [vmem:[#allocation6 + $0xcc] sm:$0xf]
        %v459 = vld [vmem:[#allocation6 + $0xd0] sm:$0xf]
        %v460 = vld [vmem:[#allocation6 + $0xd4] sm:$0xf]
        %v461 = vld [vmem:[#allocation6 + $0xd8] sm:$0xf]
        %v462 = vld [vmem:[#allocation6 + $0xdc] sm:$0xf]
        %v463 = vld [vmem:[#allocation6 + $0xe0] sm:$0xf]
        %v464 = vld [vmem:[#allocation6 + $0xe4] sm:$0xf]
        %v465 = vld [vmem:[#allocation6 + $0xe8] sm:$0xf]
        %v466 = vld [vmem:[#allocation6 + $0xec] sm:$0xf]
        %v467 = vld [vmem:[#allocation6 + $0xf0] sm:$0xf]
        %v468 = vld [vmem:[#allocation6 + $0xf4] sm:$0xf]
        %v469 = vld [vmem:[#allocation6 + $0xf8] sm:$0xf]
        %v470 = vld [vmem:[#allocation6 + $0xfc] sm:$0xf]
        %v535 = vunpack.c.l.b16 %v343
        %v536 = vunpack.c.h.b16 %v343
        %v537 = vunpack.c.l.b16 %v344
        %v538 = vunpack.c.h.b16 %v344
        %v539 = vunpack.c.l.b16 %v345
        %v540 = vunpack.c.h.b16 %v345
        %v541 = vunpack.c.l.b16 %v346
        %v542 = vunpack.c.h.b16 %v346
        %v543 = vunpack.c.l.b16 %v347
        %v544 = vunpack.c.h.b16 %v347
        %v545 = vunpack.c.l.b16 %v348
        %v546 = vunpack.c.h.b16 %v348
        %v547 = vunpack.c.l.b16 %v349
        %v548 = vunpack.c.h.b16 %v349
        %v549 = vunpack.c.l.b16 %v350
        %v550 = vunpack.c.h.b16 %v350
        %v551 = vunpack.c.l.b16 %v351
        %v552 = vunpack.c.h.b16 %v351
        %v553 = vunpack.c.l.b16 %v352
        %v554 = vunpack.c.h.b16 %v352
        %v555 = vunpack.c.l.b16 %v353
        %v556 = vunpack.c.h.b16 %v353
        %v557 = vunpack.c.l.b16 %v354
        %v558 = vunpack.c.h.b16 %v354
        %v559 = vunpack.c.l.b16 %v355
        %v560 = vunpack.c.h.b16 %v355
        %v561 = vunpack.c.l.b16 %v356
        %v562 = vunpack.c.h.b16 %v356
        %v563 = vunpack.c.l.b16 %v357
        %v564 = vunpack.c.h.b16 %v357
        %v565 = vunpack.c.l.b16 %v358
        %v566 = vunpack.c.h.b16 %v358
        %v567 = vunpack.c.l.b16 %v359
        %v568 = vunpack.c.h.b16 %v359
        %v569 = vunpack.c.l.b16 %v360
        %v570 = vunpack.c.h.b16 %v360
        %v571 = vunpack.c.l.b16 %v361
        %v572 = vunpack.c.h.b16 %v361
        %v573 = vunpack.c.l.b16 %v362
        %v574 = vunpack.c.h.b16 %v362
        %v575 = vunpack.c.l.b16 %v363
        %v576 = vunpack.c.h.b16 %v363
        %v577 = vunpack.c.l.b16 %v364
        %v578 = vunpack.c.h.b16 %v364
        %v579 = vunpack.c.l.b16 %v365
        %v580 = vunpack.c.h.b16 %v365
        %v581 = vunpack.c.l.b16 %v366
        %v582 = vunpack.c.h.b16 %v366
        %v583 = vunpack.c.l.b16 %v367
        %v584 = vunpack.c.h.b16 %v367
        %v585 = vunpack.c.l.b16 %v368
        %v586 = vunpack.c.h.b16 %v368
        %v587 = vunpack.c.l.b16 %v369
        %v588 = vunpack.c.h.b16 %v369
        %v589 = vunpack.c.l.b16 %v370
        %v590 = vunpack.c.h.b16 %v370
        %v591 = vunpack.c.l.b16 %v371
        %v592 = vunpack.c.h.b16 %v371
        %v593 = vunpack.c.l.b16 %v372
        %v594 = vunpack.c.h.b16 %v372
        %v595 = vunpack.c.l.b16 %v373
        %v596 = vunpack.c.h.b16 %v373
        %v597 = vunpack.c.l.b16 %v374
        %v598 = vunpack.c.h.b16 %v374
        %v599 = vunpack.c.l.b16 %v375
        %v600 = vunpack.c.h.b16 %v375
        %v601 = vunpack.c.l.b16 %v376
        %v602 = vunpack.c.h.b16 %v376
        %v603 = vunpack.c.l.b16 %v377
        %v604 = vunpack.c.h.b16 %v377
        %v605 = vunpack.c.l.b16 %v378
        %v606 = vunpack.c.h.b16 %v378
        %v607 = vunpack.c.l.b16 %v379
        %v608 = vunpack.c.h.b16 %v379
        %v609 = vunpack.c.l.b16 %v380
        %v610 = vunpack.c.h.b16 %v380
        %v611 = vunpack.c.l.b16 %v381
        %v612 = vunpack.c.h.b16 %v381
        %v613 = vunpack.c.l.b16 %v382
        %v614 = vunpack.c.h.b16 %v382
        %v615 = vunpack.c.l.b16 %v383
        %v616 = vunpack.c.h.b16 %v383
        %v617 = vunpack.c.l.b16 %v384
        %v618 = vunpack.c.h.b16 %v384
        %v619 = vunpack.c.l.b16 %v385
        %v620 = vunpack.c.h.b16 %v385
        %v621 = vunpack.c.l.b16 %v386
        %v622 = vunpack.c.h.b16 %v386
        %v623 = vunpack.c.l.b16 %v387
        %v624 = vunpack.c.h.b16 %v387
        %v625 = vunpack.c.l.b16 %v388
        %v626 = vunpack.c.h.b16 %v388
        %v627 = vunpack.c.l.b16 %v389
        %v628 = vunpack.c.h.b16 %v389
        %v629 = vunpack.c.l.b16 %v390
        %v630 = vunpack.c.h.b16 %v390
        %v631 = vunpack.c.l.b16 %v391
        %v632 = vunpack.c.h.b16 %v391
        %v633 = vunpack.c.l.b16 %v392
        %v634 = vunpack.c.h.b16 %v392
        %v635 = vunpack.c.l.b16 %v393
        %v636 = vunpack.c.h.b16 %v393
        %v637 = vunpack.c.l.b16 %v394
        %v638 = vunpack.c.h.b16 %v394
        %v639 = vunpack.c.l.b16 %v395
        %v640 = vunpack.c.h.b16 %v395
        %v641 = vunpack.c.l.b16 %v396
        %v642 = vunpack.c.h.b16 %v396
        %v643 = vunpack.c.l.b16 %v397
        %v644 = vunpack.c.h.b16 %v397
        %v645 = vunpack.c.l.b16 %v398
        %v646 = vunpack.c.h.b16 %v398
        %v647 = vunpack.c.l.b16 %v399
        %v648 = vunpack.c.h.b16 %v399
        %v649 = vunpack.c.l.b16 %v400
        %v650 = vunpack.c.h.b16 %v400
        %v651 = vunpack.c.l.b16 %v401
        %v652 = vunpack.c.h.b16 %v401
        %v653 = vunpack.c.l.b16 %v402
        %v654 = vunpack.c.h.b16 %v402
        %v655 = vunpack.c.l.b16 %v403
        %v656 = vunpack.c.h.b16 %v403
        %v657 = vunpack.c.l.b16 %v404
        %v658 = vunpack.c.h.b16 %v404
        %v659 = vunpack.c.l.b16 %v405
        %v660 = vunpack.c.h.b16 %v405
        %v661 = vunpack.c.l.b16 %v406
        %v662 = vunpack.c.h.b16 %v406
        %v663 = vpack.c.b16 %v539, %v535
        %v664 = vpack.c.b16 %v540, %v536
        %v665 = vpack.c.b16 %v541, %v537
        %v666 = vpack.c.b16 %v542, %v538
        %v667 = vpack.c.b16 %v547, %v543
        %v668 = vpack.c.b16 %v548, %v544
        %v669 = vpack.c.b16 %v549, %v545
        %v670 = vpack.c.b16 %v550, %v546
        %v671 = vpack.c.b16 %v555, %v551
        %v672 = vpack.c.b16 %v556, %v552
        %v673 = vpack.c.b16 %v557, %v553
        %v674 = vpack.c.b16 %v558, %v554
        %v675 = vpack.c.b16 %v563, %v559
        %v676 = vpack.c.b16 %v564, %v560
        %v677 = vpack.c.b16 %v565, %v561
        %v678 = vpack.c.b16 %v566, %v562
        %v679 = vpack.c.b16 %v571, %v567
        %v680 = vpack.c.b16 %v572, %v568
        %v681 = vpack.c.b16 %v573, %v569
        %v682 = vpack.c.b16 %v574, %v570
        %v683 = vpack.c.b16 %v579, %v575
        %v684 = vpack.c.b16 %v580, %v576
        %v685 = vpack.c.b16 %v581, %v577
        %v686 = vpack.c.b16 %v582, %v578
        %v687 = vpack.c.b16 %v587, %v583
        %v688 = vpack.c.b16 %v588, %v584
        %v689 = vpack.c.b16 %v589, %v585
        %v690 = vpack.c.b16 %v590, %v586
        %v691 = vpack.c.b16 %v595, %v591
        %v692 = vpack.c.b16 %v596, %v592
        %v693 = vpack.c.b16 %v597, %v593
        %v694 = vpack.c.b16 %v598, %v594
        %v695 = vpack.c.b16 %v603, %v599
        %v696 = vpack.c.b16 %v604, %v600
        %v697 = vpack.c.b16 %v605, %v601
        %v698 = vpack.c.b16 %v606, %v602
        %v699 = vpack.c.b16 %v611, %v607
        %v700 = vpack.c.b16 %v612, %v608
        %v701 = vpack.c.b16 %v613, %v609
        %v702 = vpack.c.b16 %v614, %v610
        %v703 = vpack.c.b16 %v619, %v615
        %v704 = vpack.c.b16 %v620, %v616
        %v705 = vpack.c.b16 %v621, %v617
        %v706 = vpack.c.b16 %v622, %v618
        %v707 = vpack.c.b16 %v627, %v623
        %v708 = vpack.c.b16 %v628, %v624
        %v709 = vpack.c.b16 %v629, %v625
        %v710 = vpack.c.b16 %v630, %v626
        %v711 = vpack.c.b16 %v635, %v631
        %v712 = vpack.c.b16 %v636, %v632
        %v713 = vpack.c.b16 %v637, %v633
        %v714 = vpack.c.b16 %v638, %v634
        %v715 = vpack.c.b16 %v643, %v639
        %v716 = vpack.c.b16 %v644, %v640
        %v717 = vpack.c.b16 %v645, %v641
        %v718 = vpack.c.b16 %v646, %v642
        %v719 = vpack.c.b16 %v651, %v647
        %v720 = vpack.c.b16 %v652, %v648
        %v721 = vpack.c.b16 %v653, %v649
        %v722 = vpack.c.b16 %v654, %v650
        %v723 = vpack.c.b16 %v659, %v655
        %v724 = vpack.c.b16 %v660, %v656
        %v725 = vpack.c.b16 %v661, %v657
        %v726 = vpack.c.b16 %v662, %v658
        %v855 = vunpack.c.l.b16 %v407
        %v856 = vunpack.c.l.b16 %v408
        %v857 = vunpack.c.l.b16 %v409
        %v858 = vunpack.c.l.b16 %v410
        %v859 = vunpack.c.l.b16 %v411
        %v860 = vunpack.c.l.b16 %v412
        %v861 = vunpack.c.l.b16 %v413
        %v862 = vunpack.c.l.b16 %v414
        %v863 = vunpack.c.l.b16 %v415
        %v864 = vunpack.c.l.b16 %v416
        %v865 = vunpack.c.l.b16 %v417
        %v866 = vunpack.c.l.b16 %v418
        %v867 = vunpack.c.l.b16 %v419
        %v868 = vunpack.c.l.b16 %v420
        %v869 = vunpack.c.l.b16 %v421
        %v870 = vunpack.c.l.b16 %v422
        %v871 = vunpack.c.l.b16 %v423
        %v872 = vunpack.c.l.b16 %v424
        %v873 = vunpack.c.l.b16 %v425
        %v874 = vunpack.c.l.b16 %v426
        %v875 = vunpack.c.l.b16 %v427
        %v876 = vunpack.c.l.b16 %v428
        %v877 = vunpack.c.l.b16 %v429
        %v878 = vunpack.c.l.b16 %v430
        %v879 = vunpack.c.l.b16 %v431
        %v880 = vunpack.c.l.b16 %v432
        %v881 = vunpack.c.l.b16 %v433
        %v882 = vunpack.c.l.b16 %v434
        %v883 = vunpack.c.l.b16 %v435
        %v884 = vunpack.c.l.b16 %v436
        %v885 = vunpack.c.l.b16 %v437
        %v886 = vunpack.c.l.b16 %v438
        %v887 = vunpack.c.l.b16 %v439
        %v888 = vunpack.c.l.b16 %v440
        %v889 = vunpack.c.l.b16 %v441
        %v890 = vunpack.c.l.b16 %v442
        %v891 = vunpack.c.l.b16 %v443
        %v892 = vunpack.c.l.b16 %v444
        %v893 = vunpack.c.l.b16 %v445
        %v894 = vunpack.c.l.b16 %v446
        %v895 = vunpack.c.l.b16 %v447
        %v896 = vunpack.c.l.b16 %v448
        %v897 = vunpack.c.l.b16 %v449
        %v898 = vunpack.c.l.b16 %v450
        %v899 = vunpack.c.l.b16 %v451
        %v900 = vunpack.c.l.b16 %v452
        %v901 = vunpack.c.l.b16 %v453
        %v902 = vunpack.c.l.b16 %v454
        %v903 = vunpack.c.l.b16 %v455
        %v904 = vunpack.c.l.b16 %v456
        %v905 = vunpack.c.l.b16 %v457
        %v906 = vunpack.c.l.b16 %v458
        %v907 = vunpack.c.l.b16 %v459
        %v908 = vunpack.c.l.b16 %v460
        %v909 = vunpack.c.l.b16 %v461
        %v910 = vunpack.c.l.b16 %v462
        %v911 = vunpack.c.l.b16 %v463
        %v912 = vunpack.c.l.b16 %v464
        %v913 = vunpack.c.l.b16 %v465
        %v914 = vunpack.c.l.b16 %v466
        %v915 = vunpack.c.l.b16 %v467
        %v916 = vunpack.c.l.b16 %v468
        %v917 = vunpack.c.l.b16 %v469
        %v918 = vunpack.c.l.b16 %v470
        %v919 = vpack.c.b16 %v856, %v855
        %v920 = vpack.c.b16 %v858, %v857
        %v921 = vpack.c.b16 %v860, %v859
        %v922 = vpack.c.b16 %v862, %v861
        %v923 = vpack.c.b16 %v864, %v863
        %v924 = vpack.c.b16 %v866, %v865
        %v925 = vpack.c.b16 %v868, %v867
        %v926 = vpack.c.b16 %v870, %v869
        %v927 = vpack.c.b16 %v872, %v871
        %v928 = vpack.c.b16 %v874, %v873
        %v929 = vpack.c.b16 %v876, %v875
        %v930 = vpack.c.b16 %v878, %v877
        %v931 = vpack.c.b16 %v880, %v879
        %v932 = vpack.c.b16 %v882, %v881
        %v933 = vpack.c.b16 %v884, %v883
        %v934 = vpack.c.b16 %v886, %v885
        %v935 = vpack.c.b16 %v888, %v887
        %v936 = vpack.c.b16 %v890, %v889
        %v937 = vpack.c.b16 %v892, %v891
        %v938 = vpack.c.b16 %v894, %v893
        %v939 = vpack.c.b16 %v896, %v895
        %v940 = vpack.c.b16 %v898, %v897
        %v941 = vpack.c.b16 %v900, %v899
        %v942 = vpack.c.b16 %v902, %v901
        %v943 = vpack.c.b16 %v904, %v903
        %v944 = vpack.c.b16 %v906, %v905
        %v945 = vpack.c.b16 %v908, %v907
        %v946 = vpack.c.b16 %v910, %v909
        %v947 = vpack.c.b16 %v912, %v911
        %v948 = vpack.c.b16 %v914, %v913
        %v949 = vpack.c.b16 %v916, %v915
        %v950 = vpack.c.b16 %v918, %v917
        %983 = vmatprep.subr.bf16.mxu0 0
        %984 = vmatpush1.bf16.msra.mxu0 %v926
        %985 = vmatprep.subr.bf16.mxu0 0
        %986 = vmatpush1.bf16.msra.mxu0 %v925
        %987 = vmatprep.subr.bf16.mxu0 0
        %988 = vmatpush1.bf16.msra.mxu0 %v924
        %989 = vmatprep.subr.bf16.mxu0 0
        %990 = vmatpush1.bf16.msra.mxu0 %v923
        %991 = vmatprep.subr.bf16.mxu0 0
        %992 = vmatpush1.bf16.msra.mxu0 %v922
        %993 = vmatprep.subr.bf16.mxu0 0
        %994 = vmatpush1.bf16.msra.mxu0 %v921
        %995 = vmatprep.subr.bf16.mxu0 0
        %996 = vmatpush1.bf16.msra.mxu0 %v920
        %997 = vmatprep.subr.bf16.mxu0 0
        %998 = vmatpush1.bf16.msra.mxu0 %v919
        %999 = vmatprep.subr.bf16.mxu0 0
        %1000 = vmatpush2.bf16.msra.mxu0 %v934
        %1001 = vmatprep.subr.bf16.mxu0 0
        %1002 = vmatpush2.bf16.msra.mxu0 %v933
        %1003 = vmatprep.subr.bf16.mxu0 0
        %1004 = vmatpush2.bf16.msra.mxu0 %v932
        %1005 = vmatprep.subr.bf16.mxu0 0
        %1006 = vmatpush2.bf16.msra.mxu0 %v931
        %1007 = vmatprep.subr.bf16.mxu0 0
        %1008 = vmatpush2.bf16.msra.mxu0 %v930
        %1009 = vmatprep.subr.bf16.mxu0 0
        %1010 = vmatpush2.bf16.msra.mxu0 %v929
        %1011 = vmatprep.subr.bf16.mxu0 0
        %1012 = vmatpush2.bf16.msra.mxu0 %v928
        %1013 = vmatprep.subr.bf16.mxu0 0
        %1014 = vmatpush2.bf16.msra.mxu0 %v927
        %1015 = vmatprep.mubr.bf16.mxu0 %v664
        %1016 = vmatmul.mubr.bf16.gmra.mxu0 %v663
        %v1017 = vpop.f32.mrf.mxu0
        %v1018 = vadd.f32 0.0, %v1017
        %v1019 = vpop.f32.mrf.mxu0
        %v1020 = vpop.f32.mrf.mxu0
        %v1021 = vadd.f32 0.0, %v1020
        %v1022 = vpop.f32.mrf.mxu0
        %1023 = vmatprep.mubr.bf16.mxu0 %v668
        %1024 = vmatmul.mubr.bf16.gmra.mxu0 %v667
        %v1025 = vpop.f32.mrf.mxu0
        %v1026 = vadd.f32 0.0, %v1025
        %v1027 = vpop.f32.mrf.mxu0
        %v1028 = vpop.f32.mrf.mxu0
        %v1029 = vadd.f32 0.0, %v1028
        %v1030 = vpop.f32.mrf.mxu0
        %1031 = vmatprep.mubr.bf16.mxu0 %v672
        %1032 = vmatmul.mubr.bf16.gmra.mxu0 %v671
        %v1033 = vpop.f32.mrf.mxu0
        %v1034 = vadd.f32 0.0, %v1033
        %v1035 = vpop.f32.mrf.mxu0
        %v1036 = vpop.f32.mrf.mxu0
        %v1037 = vadd.f32 0.0, %v1036
        %v1038 = vpop.f32.mrf.mxu0
        %1039 = vmatprep.mubr.bf16.mxu0 %v676
        %1040 = vmatmul.mubr.bf16.gmra.mxu0 %v675
        %v1041 = vpop.f32.mrf.mxu0
        %v1042 = vadd.f32 0.0, %v1041
        %v1043 = vpop.f32.mrf.mxu0
        %v1044 = vpop.f32.mrf.mxu0
        %v1045 = vadd.f32 0.0, %v1044
        %v1046 = vpop.f32.mrf.mxu0
        %1047 = vmatprep.mubr.bf16.mxu0 %v680
        %1048 = vmatmul.mubr.bf16.gmra.mxu0 %v679
        %v1049 = vpop.f32.mrf.mxu0
        %v1050 = vadd.f32 0.0, %v1049
        %v1051 = vpop.f32.mrf.mxu0
        %v1052 = vpop.f32.mrf.mxu0
        %v1053 = vadd.f32 0.0, %v1052
        %v1054 = vpop.f32.mrf.mxu0
        %1055 = vmatprep.mubr.bf16.mxu0 %v684
        %1056 = vmatmul.mubr.bf16.gmra.mxu0 %v683
        %v1057 = vpop.f32.mrf.mxu0
        %v1058 = vadd.f32 0.0, %v1057
        %v1059 = vpop.f32.mrf.mxu0
        %v1060 = vpop.f32.mrf.mxu0
        %v1061 = vadd.f32 0.0, %v1060
        %v1062 = vpop.f32.mrf.mxu0
        %1063 = vmatprep.mubr.bf16.mxu0 %v688
        %1064 = vmatmul.mubr.bf16.gmra.mxu0 %v687
        %v1065 = vpop.f32.mrf.mxu0
        %v1066 = vadd.f32 0.0, %v1065
        %v1067 = vpop.f32.mrf.mxu0
        %v1068 = vpop.f32.mrf.mxu0
        %v1069 = vadd.f32 0.0, %v1068
        %v1070 = vpop.f32.mrf.mxu0
        %1071 = vmatprep.mubr.bf16.mxu0 %v692
        %1072 = vmatmul.mubr.bf16.gmra.mxu0 %v691
        %v1073 = vpop.f32.mrf.mxu0
        %v1074 = vadd.f32 0.0, %v1073
        %v1075 = vpop.f32.mrf.mxu0
        %v1076 = vpop.f32.mrf.mxu0
        %v1077 = vadd.f32 0.0, %v1076
        %v1078 = vpop.f32.mrf.mxu0
        %1079 = vmatprep.mubr.bf16.mxu0 %v696
        %1080 = vmatmul.mubr.bf16.gmra.mxu0 %v695
        %v1081 = vpop.f32.mrf.mxu0
        %v1082 = vadd.f32 0.0, %v1081
        %v1083 = vpop.f32.mrf.mxu0
        %v1084 = vpop.f32.mrf.mxu0
        %v1085 = vadd.f32 0.0, %v1084
        %v1086 = vpop.f32.mrf.mxu0
        %1087 = vmatprep.mubr.bf16.mxu0 %v700
        %1088 = vmatmul.mubr.bf16.gmra.mxu0 %v699
        %v1089 = vpop.f32.mrf.mxu0
        %v1090 = vadd.f32 0.0, %v1089
        %v1091 = vpop.f32.mrf.mxu0
        %v1092 = vpop.f32.mrf.mxu0
        %v1093 = vadd.f32 0.0, %v1092
        %v1094 = vpop.f32.mrf.mxu0
        %1095 = vmatprep.mubr.bf16.mxu0 %v704
        %1096 = vmatmul.mubr.bf16.gmra.mxu0 %v703
        %v1097 = vpop.f32.mrf.mxu0
        %v1098 = vadd.f32 0.0, %v1097
        %v1099 = vpop.f32.mrf.mxu0
        %v1100 = vpop.f32.mrf.mxu0
        %v1101 = vadd.f32 0.0, %v1100
        %v1102 = vpop.f32.mrf.mxu0
        %1103 = vmatprep.mubr.bf16.mxu0 %v708
        %1104 = vmatmul.mubr.bf16.gmra.mxu0 %v707
        %v1105 = vpop.f32.mrf.mxu0
        %v1106 = vadd.f32 0.0, %v1105
        %v1107 = vpop.f32.mrf.mxu0
        %v1108 = vpop.f32.mrf.mxu0
        %v1109 = vadd.f32 0.0, %v1108
        %v1110 = vpop.f32.mrf.mxu0
        %1111 = vmatprep.mubr.bf16.mxu0 %v712
        %1112 = vmatmul.mubr.bf16.gmra.mxu0 %v711
        %v1113 = vpop.f32.mrf.mxu0
        %v1114 = vadd.f32 0.0, %v1113
        %v1115 = vpop.f32.mrf.mxu0
        %v1116 = vpop.f32.mrf.mxu0
        %v1117 = vadd.f32 0.0, %v1116
        %v1118 = vpop.f32.mrf.mxu0
        %1119 = vmatprep.mubr.bf16.mxu0 %v716
        %1120 = vmatmul.mubr.bf16.gmra.mxu0 %v715
        %v1121 = vpop.f32.mrf.mxu0
        %v1122 = vadd.f32 0.0, %v1121
        %v1123 = vpop.f32.mrf.mxu0
        %v1124 = vpop.f32.mrf.mxu0
        %v1125 = vadd.f32 0.0, %v1124
        %v1126 = vpop.f32.mrf.mxu0
        %1127 = vmatprep.mubr.bf16.mxu0 %v720
        %1128 = vmatmul.mubr.bf16.gmra.mxu0 %v719
        %v1129 = vpop.f32.mrf.mxu0
        %v1130 = vadd.f32 0.0, %v1129
        %v1131 = vpop.f32.mrf.mxu0
        %v1132 = vpop.f32.mrf.mxu0
        %v1133 = vadd.f32 0.0, %v1132
        %v1134 = vpop.f32.mrf.mxu0
        %1135 = vmatprep.mubr.bf16.mxu0 %v724
        %1136 = vmatmul.mubr.bf16.gmra.mxu0 %v723
        %v1137 = vpop.f32.mrf.mxu0
        %v1138 = vadd.f32 0.0, %v1137
        %v1139 = vpop.f32.mrf.mxu0
        %v1140 = vpop.f32.mrf.mxu0
        %v1141 = vadd.f32 0.0, %v1140
        %v1142 = vpop.f32.mrf.mxu0
        %1143 = vdwg.mxu0
        %1144 = vmatprep.subr.bf16.mxu0 0
        %1145 = vmatpush1.bf16.msra.mxu0 %v942
        %1146 = vmatprep.subr.bf16.mxu0 0
        %1147 = vmatpush1.bf16.msra.mxu0 %v941
        %1148 = vmatprep.subr.bf16.mxu0 0
        %1149 = vmatpush1.bf16.msra.mxu0 %v940
        %1150 = vmatprep.subr.bf16.mxu0 0
        %1151 = vmatpush1.bf16.msra.mxu0 %v939
        %1152 = vmatprep.subr.bf16.mxu0 0
        %1153 = vmatpush1.bf16.msra.mxu0 %v938
        %1154 = vmatprep.subr.bf16.mxu0 0
        %1155 = vmatpush1.bf16.msra.mxu0 %v937
        %1156 = vmatprep.subr.bf16.mxu0 0
        %1157 = vmatpush1.bf16.msra.mxu0 %v936
        %1158 = vmatprep.subr.bf16.mxu0 0
        %1159 = vmatpush1.bf16.msra.mxu0 %v935
        %1160 = vmatprep.subr.bf16.mxu0 0
        %1161 = vmatpush2.bf16.msra.mxu0 %v950
        %1162 = vmatprep.subr.bf16.mxu0 0
        %1163 = vmatpush2.bf16.msra.mxu0 %v949
        %1164 = vmatprep.subr.bf16.mxu0 0
        %1165 = vmatpush2.bf16.msra.mxu0 %v948
        %1166 = vmatprep.subr.bf16.mxu0 0
        %1167 = vmatpush2.bf16.msra.mxu0 %v947
        %1168 = vmatprep.subr.bf16.mxu0 0
        %1169 = vmatpush2.bf16.msra.mxu0 %v946
        %1170 = vmatprep.subr.bf16.mxu0 0
        %1171 = vmatpush2.bf16.msra.mxu0 %v945
        %1172 = vmatprep.subr.bf16.mxu0 0
        %1173 = vmatpush2.bf16.msra.mxu0 %v944
        %1174 = vmatprep.subr.bf16.mxu0 0
        %1175 = vmatpush2.bf16.msra.mxu0 %v943
        %1176 = vmatprep.mubr.bf16.mxu0 %v666
        %1177 = vmatmul.mubr.bf16.gmra.mxu0 %v665
        %v1178 = vpop.f32.mrf.mxu0
        %v1179 = vadd.f32 %v1018, %v1178
        %v1180 = vpop.f32.mrf.mxu0
        %v1181 = vpop.f32.mrf.mxu0
        %v1182 = vadd.f32 %v1021, %v1181
        %v1183 = vpop.f32.mrf.mxu0
        %1184 = vmatprep.mubr.bf16.mxu0 %v670
        %1185 = vmatmul.mubr.bf16.gmra.mxu0 %v669
        %v1186 = vpop.f32.mrf.mxu0
        %v1187 = vadd.f32 %v1026, %v1186
        %v1188 = vpop.f32.mrf.mxu0
        %v1189 = vpop.f32.mrf.mxu0
        %v1190 = vadd.f32 %v1029, %v1189
        %v1191 = vpop.f32.mrf.mxu0
        %1192 = vmatprep.mubr.bf16.mxu0 %v674
        %1193 = vmatmul.mubr.bf16.gmra.mxu0 %v673
        %v1194 = vpop.f32.mrf.mxu0
        %v1195 = vadd.f32 %v1034, %v1194
        %v1196 = vpop.f32.mrf.mxu0
        %v1197 = vpop.f32.mrf.mxu0
        %v1198 = vadd.f32 %v1037, %v1197
        %v1199 = vpop.f32.mrf.mxu0
        %1200 = vmatprep.mubr.bf16.mxu0 %v678
        %1201 = vmatmul.mubr.bf16.gmra.mxu0 %v677
        %v1202 = vpop.f32.mrf.mxu0
        %v1203 = vadd.f32 %v1042, %v1202
        %v1204 = vpop.f32.mrf.mxu0
        %v1205 = vpop.f32.mrf.mxu0
        %v1206 = vadd.f32 %v1045, %v1205
        %v1207 = vpop.f32.mrf.mxu0
        %1208 = vmatprep.mubr.bf16.mxu0 %v682
        %1209 = vmatmul.mubr.bf16.gmra.mxu0 %v681
        %v1210 = vpop.f32.mrf.mxu0
        %v1211 = vadd.f32 %v1050, %v1210
        %v1212 = vpop.f32.mrf.mxu0
        %v1213 = vpop.f32.mrf.mxu0
        %v1214 = vadd.f32 %v1053, %v1213
        %v1215 = vpop.f32.mrf.mxu0
        %1216 = vmatprep.mubr.bf16.mxu0 %v686
        %1217 = vmatmul.mubr.bf16.gmra.mxu0 %v685
        %v1218 = vpop.f32.mrf.mxu0
        %v1219 = vadd.f32 %v1058, %v1218
        %v1220 = vpop.f32.mrf.mxu0
        %v1221 = vpop.f32.mrf.mxu0
        %v1222 = vadd.f32 %v1061, %v1221
        %v1223 = vpop.f32.mrf.mxu0
        %1224 = vmatprep.mubr.bf16.mxu0 %v690
        %1225 = vmatmul.mubr.bf16.gmra.mxu0 %v689
        %v1226 = vpop.f32.mrf.mxu0
        %v1227 = vadd.f32 %v1066, %v1226
        %v1228 = vpop.f32.mrf.mxu0
        %v1229 = vpop.f32.mrf.mxu0
        %v1230 = vadd.f32 %v1069, %v1229
        %v1231 = vpop.f32.mrf.mxu0
        %1232 = vmatprep.mubr.bf16.mxu0 %v694
        %1233 = vmatmul.mubr.bf16.gmra.mxu0 %v693
        %v1234 = vpop.f32.mrf.mxu0
        %v1235 = vadd.f32 %v1074, %v1234
        %v1236 = vpop.f32.mrf.mxu0
        %v1237 = vpop.f32.mrf.mxu0
        %v1238 = vadd.f32 %v1077, %v1237
        %v1239 = vpop.f32.mrf.mxu0
        %1240 = vmatprep.mubr.bf16.mxu0 %v698
        %1241 = vmatmul.mubr.bf16.gmra.mxu0 %v697
        %v1242 = vpop.f32.mrf.mxu0
        %v1243 = vadd.f32 %v1082, %v1242
        %v1244 = vpop.f32.mrf.mxu0
        %v1245 = vpop.f32.mrf.mxu0
        %v1246 = vadd.f32 %v1085, %v1245
        %v1247 = vpop.f32.mrf.mxu0
        %1248 = vmatprep.mubr.bf16.mxu0 %v702
        %1249 = vmatmul.mubr.bf16.gmra.mxu0 %v701
        %v1250 = vpop.f32.mrf.mxu0
        %v1251 = vadd.f32 %v1090, %v1250
        %v1252 = vpop.f32.mrf.mxu0
        %v1253 = vpop.f32.mrf.mxu0
        %v1254 = vadd.f32 %v1093, %v1253
        %v1255 = vpop.f32.mrf.mxu0
        %1256 = vmatprep.mubr.bf16.mxu0 %v706
        %1257 = vmatmul.mubr.bf16.gmra.mxu0 %v705
        %v1258 = vpop.f32.mrf.mxu0
        %v1259 = vadd.f32 %v1098, %v1258
        %v1260 = vpop.f32.mrf.mxu0
        %v1261 = vpop.f32.mrf.mxu0
        %v1262 = vadd.f32 %v1101, %v1261
        %v1263 = vpop.f32.mrf.mxu0
        %1264 = vmatprep.mubr.bf16.mxu0 %v710
        %1265 = vmatmul.mubr.bf16.gmra.mxu0 %v709
        %v1266 = vpop.f32.mrf.mxu0
        %v1267 = vadd.f32 %v1106, %v1266
        %v1268 = vpop.f32.mrf.mxu0
        %v1269 = vpop.f32.mrf.mxu0
        %v1270 = vadd.f32 %v1109, %v1269
        %v1271 = vpop.f32.mrf.mxu0
        %1272 = vmatprep.mubr.bf16.mxu0 %v714
        %1273 = vmatmul.mubr.bf16.gmra.mxu0 %v713
        %v1274 = vpop.f32.mrf.mxu0
        %v1275 = vadd.f32 %v1114, %v1274
        %v1276 = vpop.f32.mrf.mxu0
        %v1277 = vpop.f32.mrf.mxu0
        %v1278 = vadd.f32 %v1117, %v1277
        %v1279 = vpop.f32.mrf.mxu0
        %1280 = vmatprep.mubr.bf16.mxu0 %v718
        %1281 = vmatmul.mubr.bf16.gmra.mxu0 %v717
        %v1282 = vpop.f32.mrf.mxu0
        %v1283 = vadd.f32 %v1122, %v1282
        %v1284 = vpop.f32.mrf.mxu0
        %v1285 = vpop.f32.mrf.mxu0
        %v1286 = vadd.f32 %v1125, %v1285
        %v1287 = vpop.f32.mrf.mxu0
        %1288 = vmatprep.mubr.bf16.mxu0 %v722
        %1289 = vmatmul.mubr.bf16.gmra.mxu0 %v721
        %v1290 = vpop.f32.mrf.mxu0
        %v1291 = vadd.f32 %v1130, %v1290
        %v1292 = vpop.f32.mrf.mxu0
        %v1293 = vpop.f32.mrf.mxu0
        %v1294 = vadd.f32 %v1133, %v1293
        %v1295 = vpop.f32.mrf.mxu0
        %1296 = vmatprep.mubr.bf16.mxu0 %v726
        %1297 = vmatmul.mubr.bf16.gmra.mxu0 %v725
        %v1298 = vpop.f32.mrf.mxu0
        %v1299 = vadd.f32 %v1138, %v1298
        %v1300 = vpop.f32.mrf.mxu0
        %v1301 = vpop.f32.mrf.mxu0
        %v1302 = vadd.f32 %v1141, %v1301
        %v1303 = vpop.f32.mrf.mxu0
        %1304 = vdwg.mxu0
        %v1305 = vadd.f32 %v311, %v1179
        %v1306 = vadd.f32 %v312, %v1182
        %v1307 = vadd.f32 %v313, %v1187
        %v1308 = vadd.f32 %v314, %v1190
        %v1309 = vadd.f32 %v315, %v1195
        %v1310 = vadd.f32 %v316, %v1198
        %v1311 = vadd.f32 %v317, %v1203
        %v1312 = vadd.f32 %v318, %v1206
        %v1313 = vadd.f32 %v319, %v1211
        %v1314 = vadd.f32 %v320, %v1214
        %v1315 = vadd.f32 %v321, %v1219
        %v1316 = vadd.f32 %v322, %v1222
        %v1317 = vadd.f32 %v323, %v1227
        %v1318 = vadd.f32 %v324, %v1230
        %v1319 = vadd.f32 %v325, %v1235
        %v1320 = vadd.f32 %v326, %v1238
        %v1321 = vadd.f32 %v327, %v1243
        %v1322 = vadd.f32 %v328, %v1246
        %v1323 = vadd.f32 %v329, %v1251
        %v1324 = vadd.f32 %v330, %v1254
        %v1325 = vadd.f32 %v331, %v1259
        %v1326 = vadd.f32 %v332, %v1262
        %v1327 = vadd.f32 %v333, %v1267
        %v1328 = vadd.f32 %v334, %v1270
        %v1329 = vadd.f32 %v335, %v1275
        %v1330 = vadd.f32 %v336, %v1278
        %v1331 = vadd.f32 %v337, %v1283
        %v1332 = vadd.f32 %v338, %v1286
        %v1333 = vadd.f32 %v339, %v1291
        %v1334 = vadd.f32 %v340, %v1294
        %v1335 = vadd.f32 %v341, %v1299
        %v1336 = vadd.f32 %v342, %v1302
        %1337 = vst [vmem:[#allocation2] sm:$0xff] %v1305
        %1338 = vst [vmem:[#allocation2 + $0x8] sm:$0xff] %v1306
        %1339 = vst [vmem:[#allocation2 + $0x10] sm:$0xff] %v1307
        %1340 = vst [vmem:[#allocation2 + $0x18] sm:$0xff] %v1308
        %1341 = vst [vmem:[#allocation2 + $0x20] sm:$0xff] %v1309
        %1342 = vst [vmem:[#allocation2 + $0x28] sm:$0xff] %v1310
        %1343 = vst [vmem:[#allocation2 + $0x30] sm:$0xff] %v1311
        %1344 = vst [vmem:[#allocation2 + $0x38] sm:$0xff] %v1312
        %1345 = vst [vmem:[#allocation2 + $0x40] sm:$0xff] %v1313
        %1346 = vst [vmem:[#allocation2 + $0x48] sm:$0xff] %v1314
        %1347 = vst [vmem:[#allocation2 + $0x50] sm:$0xff] %v1315
        %1348 = vst [vmem:[#allocation2 + $0x58] sm:$0xff] %v1316
        %1349 = vst [vmem:[#allocation2 + $0x60] sm:$0xff] %v1317
        %1350 = vst [vmem:[#allocation2 + $0x68] sm:$0xff] %v1318
        %1351 = vst [vmem:[#allocation2 + $0x70] sm:$0xff] %v1319
        %1352 = vst [vmem:[#allocation2 + $0x78] sm:$0xff] %v1320
        %1353 = vst [vmem:[#allocation2 + $0x80] sm:$0xff] %v1321
        %1354 = vst [vmem:[#allocation2 + $0x88] sm:$0xff] %v1322
        %1355 = vst [vmem:[#allocation2 + $0x90] sm:$0xff] %v1323
        %1356 = vst [vmem:[#allocation2 + $0x98] sm:$0xff] %v1324
        %1357 = vst [vmem:[#allocation2 + $0xa0] sm:$0xff] %v1325
        %1358 = vst [vmem:[#allocation2 + $0xa8] sm:$0xff] %v1326
        %1359 = vst [vmem:[#allocation2 + $0xb0] sm:$0xff] %v1327
        %1360 = vst [vmem:[#allocation2 + $0xb8] sm:$0xff] %v1328
        %1361 = vst [vmem:[#allocation2 + $0xc0] sm:$0xff] %v1329
        %1362 = vst [vmem:[#allocation2 + $0xc8] sm:$0xff] %v1330
        %1363 = vst [vmem:[#allocation2 + $0xd0] sm:$0xff] %v1331
        %1364 = vst [vmem:[#allocation2 + $0xd8] sm:$0xff] %v1332
        %1365 = vst [vmem:[#allocation2 + $0xe0] sm:$0xff] %v1333
        %1366 = vst [vmem:[#allocation2 + $0xe8] sm:$0xff] %v1334
        %1367 = vst [vmem:[#allocation2 + $0xf0] sm:$0xff] %v1335
        %1368 = vst [vmem:[#allocation2 + $0xf8] sm:$0xff] %v1336
        // Predicated region
        $region53: #{tpu_custom_call.1} parent=35 // pred_check
          %p1369 = pneg %p275
        $region54: #{tpu_custom_call.1} parent=35 // pred_check_branch
          %1371 = sbr.rel (%p1369) target = $region56
        $region55: #{tpu_custom_call.1} parent=35 // pred_region
          %v1372 = vld [vmem:[#allocation2] sm:$0xff]
          %v1373 = vld [vmem:[#allocation2 + $0x8] sm:$0xff]
          %v1374 = vld [vmem:[#allocation2 + $0x10] sm:$0xff]
          %v1375 = vld [vmem:[#allocation2 + $0x18] sm:$0xff]
          %v1376 = vld [vmem:[#allocation2 + $0x20] sm:$0xff]
          %v1377 = vld [vmem:[#allocation2 + $0x28] sm:$0xff]
          %v1378 = vld [vmem:[#allocation2 + $0x30] sm:$0xff]
          %v1379 = vld [vmem:[#allocation2 + $0x38] sm:$0xff]
          %v1380 = vld [vmem:[#allocation2 + $0x40] sm:$0xff]
          %v1381 = vld [vmem:[#allocation2 + $0x48] sm:$0xff]
          %v1382 = vld [vmem:[#allocation2 + $0x50] sm:$0xff]
          %v1383 = vld [vmem:[#allocation2 + $0x58] sm:$0xff]
          %v1384 = vld [vmem:[#allocation2 + $0x60] sm:$0xff]
          %v1385 = vld [vmem:[#allocation2 + $0x68] sm:$0xff]
          %v1386 = vld [vmem:[#allocation2 + $0x70] sm:$0xff]
          %v1387 = vld [vmem:[#allocation2 + $0x78] sm:$0xff]
          %v1388 = vld [vmem:[#allocation2 + $0x80] sm:$0xff]
          %v1389 = vld [vmem:[#allocation2 + $0x88] sm:$0xff]
          %v1390 = vld [vmem:[#allocation2 + $0x90] sm:$0xff]
          %v1391 = vld [vmem:[#allocation2 + $0x98] sm:$0xff]
          %v1392 = vld [vmem:[#allocation2 + $0xa0] sm:$0xff]
          %v1393 = vld [vmem:[#allocation2 + $0xa8] sm:$0xff]
          %v1394 = vld [vmem:[#allocation2 + $0xb0] sm:$0xff]
          %v1395 = vld [vmem:[#allocation2 + $0xb8] sm:$0xff]
          %v1396 = vld [vmem:[#allocation2 + $0xc0] sm:$0xff]
          %v1397 = vld [vmem:[#allocation2 + $0xc8] sm:$0xff]
          %v1398 = vld [vmem:[#allocation2 + $0xd0] sm:$0xff]
          %v1399 = vld [vmem:[#allocation2 + $0xd8] sm:$0xff]
          %v1400 = vld [vmem:[#allocation2 + $0xe0] sm:$0xff]
          %v1401 = vld [vmem:[#allocation2 + $0xe8] sm:$0xff]
          %v1402 = vld [vmem:[#allocation2 + $0xf0] sm:$0xff]
          %v1403 = vld [vmem:[#allocation2 + $0xf8] sm:$0xff]
          %v1404 = vpack.c.bf16 %v1373, %v1372
          %v1405 = vpack.c.bf16 %v1375, %v1374
          %v1406 = vpack.c.bf16 %v1377, %v1376
          %v1407 = vpack.c.bf16 %v1379, %v1378
          %v1408 = vpack.c.bf16 %v1381, %v1380
          %v1409 = vpack.c.bf16 %v1383, %v1382
          %v1410 = vpack.c.bf16 %v1385, %v1384
          %v1411 = vpack.c.bf16 %v1387, %v1386
          %v1412 = vpack.c.bf16 %v1389, %v1388
          %v1413 = vpack.c.bf16 %v1391, %v1390
          %v1414 = vpack.c.bf16 %v1393, %v1392
          %v1415 = vpack.c.bf16 %v1395, %v1394
          %v1416 = vpack.c.bf16 %v1397, %v1396
          %v1417 = vpack.c.bf16 %v1399, %v1398
          %v1418 = vpack.c.bf16 %v1401, %v1400
          %v1419 = vpack.c.bf16 %v1403, %v1402
          %v1420 = vld [vmem:[#allocation8] sm:$0xf]
          %v1421 = vld [vmem:[#allocation8 + $0x4] sm:$0xf]
          %v1422 = vld [vmem:[#allocation8 + $0x8] sm:$0xf]
          %v1423 = vld [vmem:[#allocation8 + $0xc] sm:$0xf]
          %v1424 = vld [vmem:[#allocation8 + $0x10] sm:$0xf]
          %v1425 = vld [vmem:[#allocation8 + $0x14] sm:$0xf]
          %v1426 = vld [vmem:[#allocation8 + $0x18] sm:$0xf]
          %v1427 = vld [vmem:[#allocation8 + $0x1c] sm:$0xf]
          %v1428 = vld [vmem:[#allocation8 + $0x20] sm:$0xf]
          %v1429 = vld [vmem:[#allocation8 + $0x24] sm:$0xf]
          %v1430 = vld [vmem:[#allocation8 + $0x28] sm:$0xf]
          %v1431 = vld [vmem:[#allocation8 + $0x2c] sm:$0xf]
          %v1432 = vld [vmem:[#allocation8 + $0x30] sm:$0xf]
          %v1433 = vld [vmem:[#allocation8 + $0x34] sm:$0xf]
          %v1434 = vld [vmem:[#allocation8 + $0x38] sm:$0xf]
          %v1435 = vld [vmem:[#allocation8 + $0x3c] sm:$0xf]
          %v1436 = vld [vmem:[%s3] sm:$0x1]
          %v1438 = vlaneseq
          %v1439 = vshrl.u32 %v1438, 7
          %v1440 = vsub.s32 0, %v1439
          %v1441 = vrot.slane %v1436, %v1440
          %v1459 = vunpack.c.l.b16 %v1420
          %v1460 = vunpack.c.l.b16 %v1421
          %v1461 = vunpack.c.l.b16 %v1422
          %v1462 = vunpack.c.l.b16 %v1423
          %v1463 = vunpack.c.l.b16 %v1424
          %v1464 = vunpack.c.l.b16 %v1425
          %v1465 = vunpack.c.l.b16 %v1426
          %v1466 = vunpack.c.l.b16 %v1427
          %v1467 = vunpack.c.l.b16 %v1428
          %v1468 = vunpack.c.l.b16 %v1429
          %v1469 = vunpack.c.l.b16 %v1430
          %v1470 = vunpack.c.l.b16 %v1431
          %v1471 = vunpack.c.l.b16 %v1432
          %v1472 = vunpack.c.l.b16 %v1433
          %v1473 = vunpack.c.l.b16 %v1434
          %v1474 = vunpack.c.l.b16 %v1435
          %v1475 = vpack.c.b16 %v1460, %v1459
          %v1476 = vpack.c.b16 %v1462, %v1461
          %v1477 = vpack.c.b16 %v1464, %v1463
          %v1478 = vpack.c.b16 %v1466, %v1465
          %v1479 = vpack.c.b16 %v1468, %v1467
          %v1480 = vpack.c.b16 %v1470, %v1469
          %v1481 = vpack.c.b16 %v1472, %v1471
          %v1482 = vpack.c.b16 %v1474, %v1473
          %1491 = vmatprep.subr.bf16.mxu0 0
          %1492 = vmatpush1.bf16.msra.mxu0 %v1482
          %1493 = vmatprep.subr.bf16.mxu0 0
          %1494 = vmatpush1.bf16.msra.mxu0 %v1481
          %1495 = vmatprep.subr.bf16.mxu0 0
          %1496 = vmatpush1.bf16.msra.mxu0 %v1480
          %1497 = vmatprep.subr.bf16.mxu0 0
          %1498 = vmatpush1.bf16.msra.mxu0 %v1479
          %1499 = vmatprep.subr.bf16.mxu0 0
          %1500 = vmatpush1.bf16.msra.mxu0 %v1478
          %1501 = vmatprep.subr.bf16.mxu0 0
          %1502 = vmatpush1.bf16.msra.mxu0 %v1477
          %1503 = vmatprep.subr.bf16.mxu0 0
          %1504 = vmatpush1.bf16.msra.mxu0 %v1476
          %1505 = vmatprep.subr.bf16.mxu0 0
          %1506 = vmatpush1.bf16.msra.mxu0 %v1475
          %1507 = vmatprep.subr.bf16.mxu0 0
          %1508 = vmatpush2.bf16.msra.mxu0 0
          %1509 = vmatprep.subr.bf16.mxu0 0
          %1510 = vmatpush2.bf16.msra.mxu0 0
          %1511 = vmatprep.subr.bf16.mxu0 0
          %1512 = vmatpush2.bf16.msra.mxu0 0
          %1513 = vmatprep.subr.bf16.mxu0 0
          %1514 = vmatpush2.bf16.msra.mxu0 0
          %1515 = vmatprep.subr.bf16.mxu0 0
          %1516 = vmatpush2.bf16.msra.mxu0 0
          %1517 = vmatprep.subr.bf16.mxu0 0
          %1518 = vmatpush2.bf16.msra.mxu0 0
          %1519 = vmatprep.subr.bf16.mxu0 0
          %1520 = vmatpush2.bf16.msra.mxu0 0
          %1521 = vmatprep.subr.bf16.mxu0 0
          %1522 = vmatpush2.bf16.msra.mxu0 0
          %1523 = vmatprep.mubr.bf16.mxu0 0
          %1524 = vmatmul.mubr.bf16.gmra.mxu0 %v1404
          %v1525 = vpop.f32.mrf.mxu0
          %v1526 = vadd.f32 %v1441, %v1525
          %v1527 = vpop.f32.mrf.mxu0
          %v1528 = vpop.f32.mrf.mxu0
          %v1529 = vadd.f32 %v1441, %v1528
          %v1530 = vpop.f32.mrf.mxu0
          %1531 = vmatprep.mubr.bf16.mxu0 0
          %1532 = vmatmul.mubr.bf16.gmra.mxu0 %v1405
          %v1533 = vpop.f32.mrf.mxu0
          %v1534 = vadd.f32 %v1441, %v1533
          %v1535 = vpop.f32.mrf.mxu0
          %v1536 = vpop.f32.mrf.mxu0
          %v1537 = vadd.f32 %v1441, %v1536
          %v1538 = vpop.f32.mrf.mxu0
          %1539 = vmatprep.mubr.bf16.mxu0 0
          %1540 = vmatmul.mubr.bf16.gmra.mxu0 %v1406
          %v1541 = vpop.f32.mrf.mxu0
          %v1542 = vadd.f32 %v1441, %v1541
          %v1543 = vpop.f32.mrf.mxu0
          %v1544 = vpop.f32.mrf.mxu0
          %v1545 = vadd.f32 %v1441, %v1544
          %v1546 = vpop.f32.mrf.mxu0
          %1547 = vmatprep.mubr.bf16.mxu0 0
          %1548 = vmatmul.mubr.bf16.gmra.mxu0 %v1407
          %v1549 = vpop.f32.mrf.mxu0
          %v1550 = vadd.f32 %v1441, %v1549
          %v1551 = vpop.f32.mrf.mxu0
          %v1552 = vpop.f32.mrf.mxu0
          %v1553 = vadd.f32 %v1441, %v1552
          %v1554 = vpop.f32.mrf.mxu0
          %1555 = vmatprep.mubr.bf16.mxu0 0
          %1556 = vmatmul.mubr.bf16.gmra.mxu0 %v1408
          %v1557 = vpop.f32.mrf.mxu0
          %v1558 = vadd.f32 %v1441, %v1557
          %v1559 = vpop.f32.mrf.mxu0
          %v1560 = vpop.f32.mrf.mxu0
          %v1561 = vadd.f32 %v1441, %v1560
          %v1562 = vpop.f32.mrf.mxu0
          %1563 = vmatprep.mubr.bf16.mxu0 0
          %1564 = vmatmul.mubr.bf16.gmra.mxu0 %v1409
          %v1565 = vpop.f32.mrf.mxu0
          %v1566 = vadd.f32 %v1441, %v1565
          %v1567 = vpop.f32.mrf.mxu0
          %v1568 = vpop.f32.mrf.mxu0
          %v1569 = vadd.f32 %v1441, %v1568
          %v1570 = vpop.f32.mrf.mxu0
          %1571 = vmatprep.mubr.bf16.mxu0 0
          %1572 = vmatmul.mubr.bf16.gmra.mxu0 %v1410
          %v1573 = vpop.f32.mrf.mxu0
          %v1574 = vadd.f32 %v1441, %v1573
          %v1575 = vpop.f32.mrf.mxu0
          %v1576 = vpop.f32.mrf.mxu0
          %v1577 = vadd.f32 %v1441, %v1576
          %v1578 = vpop.f32.mrf.mxu0
          %1579 = vmatprep.mubr.bf16.mxu0 0
          %1580 = vmatmul.mubr.bf16.gmra.mxu0 %v1411
          %v1581 = vpop.f32.mrf.mxu0
          %v1582 = vadd.f32 %v1441, %v1581
          %v1583 = vpop.f32.mrf.mxu0
          %v1584 = vpop.f32.mrf.mxu0
          %v1585 = vadd.f32 %v1441, %v1584
          %v1586 = vpop.f32.mrf.mxu0
          %1587 = vmatprep.mubr.bf16.mxu0 0
          %1588 = vmatmul.mubr.bf16.gmra.mxu0 %v1412
          %v1589 = vpop.f32.mrf.mxu0
          %v1590 = vadd.f32 %v1441, %v1589
          %v1591 = vpop.f32.mrf.mxu0
          %v1592 = vpop.f32.mrf.mxu0
          %v1593 = vadd.f32 %v1441, %v1592
          %v1594 = vpop.f32.mrf.mxu0
          %1595 = vmatprep.mubr.bf16.mxu0 0
          %1596 = vmatmul.mubr.bf16.gmra.mxu0 %v1413
          %v1597 = vpop.f32.mrf.mxu0
          %v1598 = vadd.f32 %v1441, %v1597
          %v1599 = vpop.f32.mrf.mxu0
          %v1600 = vpop.f32.mrf.mxu0
          %v1601 = vadd.f32 %v1441, %v1600
          %v1602 = vpop.f32.mrf.mxu0
          %1603 = vmatprep.mubr.bf16.mxu0 0
          %1604 = vmatmul.mubr.bf16.gmra.mxu0 %v1414
          %v1605 = vpop.f32.mrf.mxu0
          %v1606 = vadd.f32 %v1441, %v1605
          %v1607 = vpop.f32.mrf.mxu0
          %v1608 = vpop.f32.mrf.mxu0
          %v1609 = vadd.f32 %v1441, %v1608
          %v1610 = vpop.f32.mrf.mxu0
          %1611 = vmatprep.mubr.bf16.mxu0 0
          %1612 = vmatmul.mubr.bf16.gmra.mxu0 %v1415
          %v1613 = vpop.f32.mrf.mxu0
          %v1614 = vadd.f32 %v1441, %v1613
          %v1615 = vpop.f32.mrf.mxu0
          %v1616 = vpop.f32.mrf.mxu0
          %v1617 = vadd.f32 %v1441, %v1616
          %v1618 = vpop.f32.mrf.mxu0
          %1619 = vmatprep.mubr.bf16.mxu0 0
          %1620 = vmatmul.mubr.bf16.gmra.mxu0 %v1416
          %v1621 = vpop.f32.mrf.mxu0
          %v1622 = vadd.f32 %v1441, %v1621
          %v1623 = vpop.f32.mrf.mxu0
          %v1624 = vpop.f32.mrf.mxu0
          %v1625 = vadd.f32 %v1441, %v1624
          %v1626 = vpop.f32.mrf.mxu0
          %1627 = vmatprep.mubr.bf16.mxu0 0
          %1628 = vmatmul.mubr.bf16.gmra.mxu0 %v1417
          %v1629 = vpop.f32.mrf.mxu0
          %v1630 = vadd.f32 %v1441, %v1629
          %v1631 = vpop.f32.mrf.mxu0
          %v1632 = vpop.f32.mrf.mxu0
          %v1633 = vadd.f32 %v1441, %v1632
          %v1634 = vpop.f32.mrf.mxu0
          %1635 = vmatprep.mubr.bf16.mxu0 0
          %1636 = vmatmul.mubr.bf16.gmra.mxu0 %v1418
          %v1637 = vpop.f32.mrf.mxu0
          %v1638 = vadd.f32 %v1441, %v1637
          %v1639 = vpop.f32.mrf.mxu0
          %v1640 = vpop.f32.mrf.mxu0
          %v1641 = vadd.f32 %v1441, %v1640
          %v1642 = vpop.f32.mrf.mxu0
          %1643 = vmatprep.mubr.bf16.mxu0 0
          %1644 = vmatmul.mubr.bf16.gmra.mxu0 %v1419
          %v1645 = vpop.f32.mrf.mxu0
          %v1646 = vadd.f32 %v1441, %v1645
          %v1647 = vpop.f32.mrf.mxu0
          %v1648 = vpop.f32.mrf.mxu0
          %v1649 = vadd.f32 %v1441, %v1648
          %v1650 = vpop.f32.mrf.mxu0
          %1651 = vdwg.mxu0
          %v1652 = vmax.f32 %v1526, 0.0
          %v1653 = vmax.f32 %v1529, 0.0
          %v1654 = vmax.f32 %v1534, 0.0
          %v1655 = vmax.f32 %v1537, 0.0
          %v1656 = vmax.f32 %v1542, 0.0
          %v1657 = vmax.f32 %v1545, 0.0
          %v1658 = vmax.f32 %v1550, 0.0
          %v1659 = vmax.f32 %v1553, 0.0
          %v1660 = vmax.f32 %v1558, 0.0
          %v1661 = vmax.f32 %v1561, 0.0
          %v1662 = vmax.f32 %v1566, 0.0
          %v1663 = vmax.f32 %v1569, 0.0
          %v1664 = vmax.f32 %v1574, 0.0
          %v1665 = vmax.f32 %v1577, 0.0
          %v1666 = vmax.f32 %v1582, 0.0
          %v1667 = vmax.f32 %v1585, 0.0
          %v1668 = vmax.f32 %v1590, 0.0
          %v1669 = vmax.f32 %v1593, 0.0
          %v1670 = vmax.f32 %v1598, 0.0
          %v1671 = vmax.f32 %v1601, 0.0
          %v1672 = vmax.f32 %v1606, 0.0
          %v1673 = vmax.f32 %v1609, 0.0
          %v1674 = vmax.f32 %v1614, 0.0
          %v1675 = vmax.f32 %v1617, 0.0
          %v1676 = vmax.f32 %v1622, 0.0
          %v1677 = vmax.f32 %v1625, 0.0
          %v1678 = vmax.f32 %v1630, 0.0
          %v1679 = vmax.f32 %v1633, 0.0
          %v1680 = vmax.f32 %v1638, 0.0
          %v1681 = vmax.f32 %v1641, 0.0
          %v1682 = vmax.f32 %v1646, 0.0
          %v1683 = vmax.f32 %v1649, 0.0
          %v1684 = vpack.c.bf16 %v1653, %v1652
          %v1685 = vpack.c.bf16 %v1655, %v1654
          %v1686 = vpack.c.bf16 %v1657, %v1656
          %v1687 = vpack.c.bf16 %v1659, %v1658
          %v1688 = vpack.c.bf16 %v1661, %v1660
          %v1689 = vpack.c.bf16 %v1663, %v1662
          %v1690 = vpack.c.bf16 %v1665, %v1664
          %v1691 = vpack.c.bf16 %v1667, %v1666
          %v1692 = vpack.c.bf16 %v1669, %v1668
          %v1693 = vpack.c.bf16 %v1671, %v1670
          %v1694 = vpack.c.bf16 %v1673, %v1672
          %v1695 = vpack.c.bf16 %v1675, %v1674
          %v1696 = vpack.c.bf16 %v1677, %v1676
          %v1697 = vpack.c.bf16 %v1679, %v1678
          %v1698 = vpack.c.bf16 %v1681, %v1680
          %v1699 = vpack.c.bf16 %v1683, %v1682
          %v1716 = vunpack.c.l.b16 %v1684
          %v1717 = vunpack.c.h.b16 %v1684
          %v1718 = vunpack.c.l.b16 %v1685
          %v1719 = vunpack.c.h.b16 %v1685
          %v1720 = vunpack.c.l.b16 %v1686
          %v1721 = vunpack.c.h.b16 %v1686
          %v1722 = vunpack.c.l.b16 %v1687
          %v1723 = vunpack.c.h.b16 %v1687
          %v1724 = vunpack.c.l.b16 %v1688
          %v1725 = vunpack.c.h.b16 %v1688
          %v1726 = vunpack.c.l.b16 %v1689
          %v1727 = vunpack.c.h.b16 %v1689
          %v1728 = vunpack.c.l.b16 %v1690
          %v1729 = vunpack.c.h.b16 %v1690
          %v1730 = vunpack.c.l.b16 %v1691
          %v1731 = vunpack.c.h.b16 %v1691
          %v1732 = vunpack.c.l.b16 %v1692
          %v1733 = vunpack.c.h.b16 %v1692
          %v1734 = vunpack.c.l.b16 %v1693
          %v1735 = vunpack.c.h.b16 %v1693
          %v1736 = vunpack.c.l.b16 %v1694
          %v1737 = vunpack.c.h.b16 %v1694
          %v1738 = vunpack.c.l.b16 %v1695
          %v1739 = vunpack.c.h.b16 %v1695
          %v1740 = vunpack.c.l.b16 %v1696
          %v1741 = vunpack.c.h.b16 %v1696
          %v1742 = vunpack.c.l.b16 %v1697
          %v1743 = vunpack.c.h.b16 %v1697
          %v1744 = vunpack.c.l.b16 %v1698
          %v1745 = vunpack.c.h.b16 %v1698
          %v1746 = vunpack.c.l.b16 %v1699
          %v1747 = vunpack.c.h.b16 %v1699
          %v1748 = vpack.c.b16 %v1716, %v1716
          %v1749 = vpack.c.b16 %v1717, %v1717
          %v1750 = vpack.c.b16 %v1718, %v1718
          %v1751 = vpack.c.b16 %v1719, %v1719
          %v1752 = vpack.c.b16 %v1720, %v1720
          %v1753 = vpack.c.b16 %v1721, %v1721
          %v1754 = vpack.c.b16 %v1722, %v1722
          %v1755 = vpack.c.b16 %v1723, %v1723
          %v1756 = vpack.c.b16 %v1724, %v1724
          %v1757 = vpack.c.b16 %v1725, %v1725
          %v1758 = vpack.c.b16 %v1726, %v1726
          %v1759 = vpack.c.b16 %v1727, %v1727
          %v1760 = vpack.c.b16 %v1728, %v1728
          %v1761 = vpack.c.b16 %v1729, %v1729
          %v1762 = vpack.c.b16 %v1730, %v1730
          %v1763 = vpack.c.b16 %v1731, %v1731
          %v1764 = vpack.c.b16 %v1732, %v1732
          %v1765 = vpack.c.b16 %v1733, %v1733
          %v1766 = vpack.c.b16 %v1734, %v1734
          %v1767 = vpack.c.b16 %v1735, %v1735
          %v1768 = vpack.c.b16 %v1736, %v1736
          %v1769 = vpack.c.b16 %v1737, %v1737
          %v1770 = vpack.c.b16 %v1738, %v1738
          %v1771 = vpack.c.b16 %v1739, %v1739
          %v1772 = vpack.c.b16 %v1740, %v1740
          %v1773 = vpack.c.b16 %v1741, %v1741
          %v1774 = vpack.c.b16 %v1742, %v1742
          %v1775 = vpack.c.b16 %v1743, %v1743
          %v1776 = vpack.c.b16 %v1744, %v1744
          %v1777 = vpack.c.b16 %v1745, %v1745
          %v1778 = vpack.c.b16 %v1746, %v1746
          %v1779 = vpack.c.b16 %v1747, %v1747
          %1812 = vst [vmem:[%s269] sm:$0xf] %v1748
          %1813 = vst [vmem:[%s269 + $0x4] sm:$0xf] %v1749
          %1814 = vst [vmem:[%s269 + $0x8] sm:$0xf] %v1750
          %1815 = vst [vmem:[%s269 + $0xc] sm:$0xf] %v1751
          %1816 = vst [vmem:[%s269 + $0x10] sm:$0xf] %v1752
          %1817 = vst [vmem:[%s269 + $0x14] sm:$0xf] %v1753
          %1818 = vst [vmem:[%s269 + $0x18] sm:$0xf] %v1754
          %1819 = vst [vmem:[%s269 + $0x1c] sm:$0xf] %v1755
          %1820 = vst [vmem:[%s269 + $0x20] sm:$0xf] %v1756
          %1821 = vst [vmem:[%s269 + $0x24] sm:$0xf] %v1757
          %1822 = vst [vmem:[%s269 + $0x28] sm:$0xf] %v1758
          %1823 = vst [vmem:[%s269 + $0x2c] sm:$0xf] %v1759
          %1824 = vst [vmem:[%s269 + $0x30] sm:$0xf] %v1760
          %1825 = vst [vmem:[%s269 + $0x34] sm:$0xf] %v1761
          %1826 = vst [vmem:[%s269 + $0x38] sm:$0xf] %v1762
          %1827 = vst [vmem:[%s269 + $0x3c] sm:$0xf] %v1763
          %1828 = vst [vmem:[%s269 + $0x40] sm:$0xf] %v1764
          %1829 = vst [vmem:[%s269 + $0x44] sm:$0xf] %v1765
          %1830 = vst [vmem:[%s269 + $0x48] sm:$0xf] %v1766
          %1831 = vst [vmem:[%s269 + $0x4c] sm:$0xf] %v1767
          %1832 = vst [vmem:[%s269 + $0x50] sm:$0xf] %v1768
          %1833 = vst [vmem:[%s269 + $0x54] sm:$0xf] %v1769
          %1834 = vst [vmem:[%s269 + $0x58] sm:$0xf] %v1770
          %1835 = vst [vmem:[%s269 + $0x5c] sm:$0xf] %v1771
          %1836 = vst [vmem:[%s269 + $0x60] sm:$0xf] %v1772
          %1837 = vst [vmem:[%s269 + $0x64] sm:$0xf] %v1773
          %1838 = vst [vmem:[%s269 + $0x68] sm:$0xf] %v1774
          %1839 = vst [vmem:[%s269 + $0x6c] sm:$0xf] %v1775
          %1840 = vst [vmem:[%s269 + $0x70] sm:$0xf] %v1776
          %1841 = vst [vmem:[%s269 + $0x74] sm:$0xf] %v1777
          %1842 = vst [vmem:[%s269 + $0x78] sm:$0xf] %v1778
          %1843 = vst [vmem:[%s269 + $0x7c] sm:$0xf] %v1779
        $region56: #{tpu_custom_call.1} parent=35 // pred_fallthru
          _
        %s1844 = sand.u32 %s138, 1
        %s1845 = scalar_lea.sflag [#allocation5], %s1844
        %s1846 = sand.u32 %s138, 1
        %s1847 = smul.addr %s1846, 128
        %s1848 = scalar_lea.vmem [#allocation9], %s1847
        // Predicated region
        $region57: #{tpu_custom_call.1} parent=35 // pred_check
          %p1849 = pneg %p148
        $region58: #{tpu_custom_call.1} parent=35 // pred_check_branch
          %1851 = sbr.rel (%p1849) target = $region60
        $region59: #{tpu_custom_call.1} parent=35 // pred_region
          %s1852 = smul.u32 32, %s26
          %s1854 = ssub.s32 2048, 2048
          %1855 = vsyncadd %s1845, %s1854
          %s1856 = smul.addr %s1852, 64
          %s1857 = scalar_lea.hbm %s4, %s1856
          %s1858 = sshll.u32 %s1848, 4
          %s1859 = int_to_ptr.vmem [resolvable:$true] %s1858
          %1864 = dma.vmem_to_hbm [thread:$0]  %s1859, 2048, %s1857, %s1845, 64, 64, 4
        $region60: #{tpu_custom_call.1} parent=35 // pred_fallthru
          _
      $region36: #{tpu_custom_call.1} parent=5 // pred_fallthru
        _
      %p1865 = scmp.le.s32.totalorder 2, %s17
      // Predicated region
      $region61: #{tpu_custom_call.1} parent=5 // pred_check
        %p1866 = pneg %p1865
      $region62: #{tpu_custom_call.1} parent=5 // pred_check_branch
        %1868 = sbr.rel (%p1866) target = $region64
      $region63: #{tpu_custom_call.1} parent=5 // pred_region
        %s1869 = ssub.s32 %s17, 2
        // Predicated region
        $region65: #{tpu_custom_call.1} parent=63 // pred_check
          %p1870 = pneg %p154
        $region66: #{tpu_custom_call.1} parent=63 // pred_check_branch
          %1872 = sbr.rel (%p1870) target = $region68
        $region67: #{tpu_custom_call.1} parent=63 // pred_region
          %s1873 = sand.u32 %s139, 1
          %s1874 = scalar_lea.sflag [#allocation5], %s1873
          %s1875 = sand.u32 %s139, 1
          %s1876 = smul.addr %s1875, 128
          %s1877 = scalar_lea.vmem [#allocation9], %s1876
          %1878 = dma.done %s1874, 2048
        $region68: #{tpu_custom_call.1} parent=63 // pred_fallthru
          _
      $region64: #{tpu_custom_call.1} parent=5 // pred_fallthru
        _
    $region6: #{tpu_custom_call.1} parent=1 // loop_footer
      %s21 = sadd.s32 1, %s17
    $region7: #{tpu_custom_call.1} parent=1 // loop_footer_branch
      %16 = sbr.rel target = $region3
    $region8: #{tpu_custom_call.1} parent=1 // loop_exit
      _
    %1879 = vsyncpa [#allocation4], 1
    %s1880 = scalar_lea.sflag [#allocation4], 1
    %1881 = vsyncpa %s1880, 1
    %1882 = vsyncpa [#allocation7], 1
    %1883 = vsyncpa [#allocation5], 1
    %s1884 = scalar_lea.sflag [#allocation5], 1
    %1885 = vsyncpa %s1884, 1

</llo_original>
